<compile_context>
chip_gen: v6e
topology: v6e:2x2x1
jax: 0.10.0
libtpu: 0.0.40
codegen_flags: <defaults>
</compile_context>

<pallas_src>
import functools

import jax
import jax.numpy as jnp
import numpy as np
from jax import lax
from jax.experimental import pallas as pl
from jax.experimental.pallas import tpu as pltpu

_GP = 128  # padded lanes per fused gate group (vreg lane width)


def _simple_lstm_kernel(S, R, H, NC,
                        x_ref, wih_ref, whh_ref, b_ref, aflat_ref,
                        rmask_ref, gmat_ref, sel_ref, beff_ref,
                        out_ref):
    """Fused bidirectional LSTM recurrence + precomposed linear head.

    Gate layout of the fused gate block (512 = 4 groups x 128 lanes):
        [ i_f i_b pad | f_f f_b pad | o_f o_b pad | g_f g_b pad ]
    Every extracted gate slice starts at a lane offset that is 0 mod 128 and is
    already in the [fwd | bwd] order of the (R, 2H) h / c state, so the
    recurrence chain has no lane rotations.  g-gate columns are pre-scaled by 2
    so a single sigmoid pass yields tanh via 2*sigmoid(2x)-1.
    """
    TWO_H = 2 * H
    G = 4 * _GP

    # ---- hoisted input projection + bias (off the recurrence chain) --------
    gx = jnp.dot(x_ref[...], wih_ref[...],
                 preferred_element_type=jnp.float32)            # (S*R, 512)
    gx = gx + b_ref[...]

    # ---- hoisted fwd/bwd time-mixing selects (loop-invariant wrt h, c) -----
    lane = lax.broadcasted_iota(jnp.int32, (R, G), 1)
    fwd_mask = (lane % _GP) < H                 # fwd half of each gate group
    g_in = [jnp.where(fwd_mask,
                      gx[t * R:(t + 1) * R, :],
                      gx[(S - 1 - t) * R:(S - t) * R, :])
            for t in range(S)]

    whh = whh_ref[...]                          # (2H, 512) block-diag, g cols x2

    h = jnp.zeros((R, TWO_H), jnp.float32)      # [h_f | h_b]
    c = jnp.zeros((R, TWO_H), jnp.float32)      # [c_f | c_b]
    h_steps = []

    # ---- fused bidirectional recurrence, statically unrolled over time -----
    for t in range(S):
        g = g_in[t] + jnp.dot(h, whh, preferred_element_type=jnp.float32)
        act = jax.nn.sigmoid(g)                 # single EUP pass over all gates
        i_gate = act[:, 0 * _GP:0 * _GP + TWO_H]        # lane offset 0
        f_gate = act[:, 1 * _GP:1 * _GP + TWO_H]        # lane offset 0 (mod 128)
        o_gate = act[:, 2 * _GP:2 * _GP + TWO_H]
        gg = 2.0 * act[:, 3 * _GP:3 * _GP + TWO_H] - 1.0   # tanh via 2*sig(2x)-1
        c = f_gate * c + i_gate * gg
        h = o_gate * jnp.tanh(c)
        h_steps.append(h)                       # kept live in vregs, no scratch

    # ---- head: fc2(flatten(fc1(out))) as 3 small off-chain matmuls ---------
    # out[s, r, 0:H] = fwd hidden of step s ; out[s, r, H:2H] = bwd hidden of
    # step S-1-s  ->  lane-masked select, no concat, no rotation.
    lane2 = lax.broadcasted_iota(jnp.int32, (R, TWO_H), 1)
    fwd2 = lane2 < H
    outs = [jnp.where(fwd2, h_steps[s], h_steps[S - 1 - s]) for s in range(S)]
    OUT = jnp.concatenate(outs, axis=0)                         # (S*R, 2H)

    # P[s*R + r', r*NC + k] = out[s, r', :] @ A3[r, :, k]
    P = jnp.dot(OUT, aflat_ref[...], preferred_element_type=jnp.float32)
    # keep only the r == r' block-diagonal, collapse column blocks, then rows
    Q = jnp.dot(P * rmask_ref[...], gmat_ref[...],
                preferred_element_type=jnp.float32)             # (S*R, NC)
    z = jnp.dot(sel_ref[...], Q, preferred_element_type=jnp.float32)
    out_ref[...] = (z + beff_ref[...]).astype(out_ref.dtype)


def simple_lstm_forward(x, p):
    """x: (S, R, C) float32.  p: host-precomposed parameter dict."""
    S, R, C = x.shape
    H = p["whh_cat"].shape[0] // 2
    NC = p["b_eff"].shape[1]

    kernel = functools.partial(_simple_lstm_kernel, S, R, H, NC)
    vmem = pl.BlockSpec(memory_space=pltpu.MemorySpace.VMEM)

    return pl.pallas_call(
        kernel,
        out_shape=jax.ShapeDtypeStruct((S, NC), jnp.float32),
        in_specs=[vmem] * 9,
        out_specs=vmem,
    )(x.reshape(S * R, C),
      p["wih_cat"], p["whh_cat"], p["b_cat"], p["a_flat"],
      p["rmask"], p["gmat"], p["sel"], p["b_eff"])


def prepare_params(raw, S, R, H, H2, NC):
    """Host-side param prep: gate reorder + direction fusion + 128-lane gate
    padding + g-gate x2 scaling + precomposed / masked head matrices."""
    HIGH = jax.lax.Precision.HIGHEST
    pad = _GP - 2 * H

    def gate_blocks(w_t):
        # (X, 4H) with PyTorch gate order [i, f, g, o] -> blocks [i, f, o, g]
        return [w_t[:, 0:H], w_t[:, H:2 * H], w_t[:, 3 * H:4 * H], w_t[:, 2 * H:3 * H]]

    # --- fused, padded input-projection weights: (C, 512) --------------------
    bf_w = gate_blocks(raw["wih_f"].T)
    bb_w = gate_blocks(raw["wih_b"].T)
    C = raw["wih_f"].shape[1]
    zc = jnp.zeros((C, pad), jnp.float32)
    wih_groups = []
    for j in range(4):
        s = 2.0 if j == 3 else 1.0          # g-gate columns scaled by 2
        wih_groups.append(jnp.concatenate([bf_w[j] * s, bb_w[j] * s, zc], axis=1))
    wih_cat = jnp.concatenate(wih_groups, axis=1)               # (C, 512)

    # --- fused, padded, block-diagonal recurrent weights: (2H, 512) ----------
    uf = gate_blocks(raw["whh_f"].T)
    ub = gate_blocks(raw["whh_b"].T)
    zH = jnp.zeros((H, H), jnp.float32)
    z2 = jnp.zeros((2 * H, pad), jnp.float32)
    whh_groups = []
    for j in range(4):
        s = 2.0 if j == 3 else 1.0
        fwd_col = jnp.concatenate([uf[j] * s, zH], axis=0)      # (2H, H)
        bwd_col = jnp.concatenate([zH, ub[j] * s], axis=0)      # (2H, H)
        whh_groups.append(jnp.concatenate([fwd_col, bwd_col, z2], axis=1))
    whh_cat = jnp.concatenate(whh_groups, axis=1)               # (2H, 512)

    # --- fused, padded biases (same column layout, g group x2) ---------------
    bf = raw["bih_f"] + raw["bhh_f"]
    bb = raw["bih_b"] + raw["bhh_b"]

    def bias_blocks(v):
        return [v[0:H], v[H:2 * H], v[3 * H:4 * H], v[2 * H:3 * H]]

    bfb, bbb = bias_blocks(bf), bias_blocks(bb)
    zp = jnp.zeros((pad,), jnp.float32)
    b_groups = []
    for j in range(4):
        s = 2.0 if j == 3 else 1.0
        b_groups.append(jnp.concatenate([bfb[j] * s, bbb[j] * s, zp]))
    b_cat = jnp.concatenate(b_groups).reshape(1, 4 * _GP)       # (1, 512)

    # --- precomposed head: fc2(flatten(fc1(out))) ----------------------------
    # z[s,k] = b_eff[k] + sum_{r,i} out[s,r,i] * A3[r,i,k]
    w2r = raw["w2"].reshape(NC, R, H2)                          # W2[k, r, j]
    a3 = jnp.einsum("jm,krj->rmk", raw["w1"], w2r, precision=HIGH)   # (R, 2H, NC)
    a_flat = jnp.transpose(a3, (1, 0, 2)).reshape(2 * H, R * NC)     # [i, r*NC+k]
    b_eff = (raw["b2"] +
             jnp.einsum("krj,j->k", w2r, raw["b1"], precision=HIGH)).reshape(1, NC)

    # masked block-diagonal contraction helpers (tiny constants)
    rows = jnp.arange(S * R)
    cols = jnp.arange(R * NC)
    rmask = ((rows[:, None] % R) == (cols[None, :] // NC)).astype(jnp.float32)
    gmat = jnp.tile(jnp.eye(NC, dtype=jnp.float32), (R, 1))     # (R*NC, NC)
    sel = ((jnp.arange(S * R)[None, :] // R)
           == jnp.arange(S)[:, None]).astype(jnp.float32)       # (S, S*R)

    return dict(wih_cat=wih_cat, whh_cat=whh_cat, b_cat=b_cat,
                a_flat=a_flat, b_eff=b_eff,
                rmask=rmask, gmat=gmat, sel=sel)


def reference_forward(x, raw):
    """Pure-JAX mirror of the PyTorch forward (for verification)."""
    S, R, C = x.shape

    def run_dir(xseq, wih, whh, bih, bhh):
        H = whh.shape[1]

        def step(carry, xt):
            h, c = carry
            g = xt @ wih.T + bih + h @ whh.T + bhh
            i, f, gg, o = jnp.split(g, 4, axis=-1)
            c = jax.nn.sigmoid(f) * c + jax.nn.sigmoid(i) * jnp.tanh(gg)
            h = jax.nn.sigmoid(o) * jnp.tanh(c)
            return (h, c), h

        h0 = jnp.zeros((R, H), jnp.float32)
        _, hs = lax.scan(step, (h0, h0), xseq)
        return hs

    hs_f = run_dir(x, raw["wih_f"], raw["whh_f"], raw["bih_f"], raw["bhh_f"])
    hs_b = run_dir(x[::-1], raw["wih_b"], raw["whh_b"],
                   raw["bih_b"], raw["bhh_b"])[::-1]
    out = jnp.concatenate([hs_f, hs_b], axis=-1)       # (S, R, 2H)
    y = out @ raw["w1"].T + raw["b1"]                  # (S, R, H2)
    yf = y.reshape(S, -1)                              # flatten(start=1, end=2)
    return yf @ raw["w2"].T + raw["b2"]                # (S, NC)


if __name__ == "__main__":
    # module hyper-parameters
    num_rows, num_columns = 8, 16
    num_classes = 5
    hidden_size_1, hidden_size_2 = 32, 16
    bidirectional = True        # kernel implements the bidirectional=True case
    S = 4                       # leading input dim (LSTM time axis)

    R, C, H, H2, NC = num_rows, num_columns, hidden_size_1, hidden_size_2, num_classes

    key = jax.random.PRNGKey(0)
    keys = jax.random.split(key, 13)

    def u(k, shape, bound):
        return jax.random.uniform(k, shape, jnp.float32, -bound, bound)

    kb = 1.0 / float(np.sqrt(H))
    k1 = 1.0 / float(np.sqrt(2 * H))
    k2 = 1.0 / float(np.sqrt(R * H2))

    # PyTorch-shaped parameters, deterministic init
    raw = dict(
        wih_f=u(keys[0], (4 * H, C), kb), whh_f=u(keys[1], (4 * H, H), kb),
        bih_f=u(keys[2], (4 * H,), kb), bhh_f=u(keys[3], (4 * H,), kb),
        wih_b=u(keys[4], (4 * H, C), kb), whh_b=u(keys[5], (4 * H, H), kb),
        bih_b=u(keys[6], (4 * H,), kb), bhh_b=u(keys[7], (4 * H,), kb),
        w1=u(keys[8], (H2, 2 * H), k1), b1=u(keys[9], (H2,), k1),
        w2=u(keys[10], (NC, R * H2), k2), b2=u(keys[11], (NC,), k2),
    )

    p = prepare_params(raw, S, R, H, H2, NC)
    x = jax.random.normal(keys[12], (S, R, C), jnp.float32)

    out = simple_lstm_forward(x, p)
    out = jax.block_until_ready(out)

    ref = reference_forward(x, raw)
    # tanh == 2*sigmoid(2x)-1 rewrite adds ~1e-5-level differences -> atol 5e-4
    np.testing.assert_allclose(np.asarray(out), np.asarray(ref),
                               rtol=1e-4, atol=5e-4)
    print("KERNEL_OK")
</pallas_src>

<mosaic_0001>
module attributes {stable_mosaic.version = 11 : i64} {
  func.func @_simple_lstm_kernel(%arg0: memref<32x16xf32, #tpu.memory_space<vmem>>, %arg1: memref<16x512xf32, #tpu.memory_space<vmem>>, %arg2: memref<64x512xf32, #tpu.memory_space<vmem>>, %arg3: memref<1x512xf32, #tpu.memory_space<vmem>>, %arg4: memref<64x40xf32, #tpu.memory_space<vmem>>, %arg5: memref<32x40xf32, #tpu.memory_space<vmem>>, %arg6: memref<40x5xf32, #tpu.memory_space<vmem>>, %arg7: memref<4x32xf32, #tpu.memory_space<vmem>>, %arg8: memref<1x5xf32, #tpu.memory_space<vmem>>, %arg9: memref<4x5xf32, #tpu.memory_space<vmem>>) attributes {dimension_semantics = [], scalar_prefetch = 0 : i64, scratch_operands = 0 : i64, tpu.core_type = #tpu.core_type<tc>} {
    %c0 = arith.constant 0 : index
    %c0_0 = arith.constant 0 : index
    %0 = vector.load %arg0[%c0, %c0_0] : memref<32x16xf32, #tpu.memory_space<vmem>>, vector<32x16xf32>
    %c0_1 = arith.constant 0 : index
    %c0_2 = arith.constant 0 : index
    %1 = vector.load %arg1[%c0_1, %c0_2] : memref<16x512xf32, #tpu.memory_space<vmem>>, vector<16x512xf32>
    %cst = arith.constant dense<0.000000e+00> : vector<32x512xf32>
    %2 = tpu.matmul %0, %1, %cst {dimension_numbers = #tpu.dot_dimension_numbers<[1], [0], [0], [1], [0, 0, 1, 1], [], []>} : vector<32x16xf32>, vector<16x512xf32>, vector<32x512xf32> -> vector<32x512xf32>
    %c0_3 = arith.constant 0 : index
    %c0_4 = arith.constant 0 : index
    %3 = vector.load %arg3[%c0_3, %c0_4] : memref<1x512xf32, #tpu.memory_space<vmem>>, vector<1x512xf32>
    %4 = vector.broadcast %3 : vector<1x512xf32> to vector<32x512xf32>
    %5 = arith.addf %2, %4 : vector<32x512xf32>
    %6 = tpu.iota {dimensions = array<i32: 1>} : vector<8x512xi32>
    %c128_i32 = arith.constant 128 : i32
    %c0_i32 = arith.constant 0 : i32
    %7 = arith.cmpi eq, %c128_i32, %c0_i32 : i32
    %c1_i32 = arith.constant 1 : i32
    %8 = arith.select %7, %c1_i32, %c128_i32 : i32
    %9 = vector.broadcast %8 : i32 to vector<8x512xi32>
    %10 = arith.remsi %6, %9 : vector<8x512xi32>
    %c0_i32_5 = arith.constant 0 : i32
    %11 = vector.broadcast %c0_i32_5 : i32 to vector<8x512xi32>
    %12 = arith.cmpi ne, %10, %11 : vector<8x512xi32>
    %c0_i32_6 = arith.constant 0 : i32
    %13 = vector.broadcast %c0_i32_6 : i32 to vector<8x512xi32>
    %14 = arith.cmpi slt, %10, %13 : vector<8x512xi32>
    %c0_i32_7 = arith.constant 0 : i32
    %15 = arith.cmpi slt, %8, %c0_i32_7 : i32
    %16 = vector.broadcast %15 : i1 to vector<8x512xi1>
    %17 = vector.broadcast %16 : vector<8x512xi1> to vector<8x512xi1>
    %18 = arith.xori %14, %17 : vector<8x512xi1>
    %19 = arith.andi %18, %12 : vector<8x512xi1>
    %20 = vector.broadcast %8 : i32 to vector<8x512xi32>
    %21 = arith.addi %10, %20 : vector<8x512xi32>
    %22 = arith.select %19, %21, %10 : vector<8x512xi1>, vector<8x512xi32>
    %c32_i32 = arith.constant 32 : i32
    %23 = vector.broadcast %c32_i32 : i32 to vector<8x512xi32>
    %24 = arith.cmpi slt, %22, %23 : vector<8x512xi32>
    %25 = vector.extract_strided_slice %5 {offsets = [0, 0], sizes = [8, 512], strides = [1, 1]} : vector<32x512xf32> to vector<8x512xf32>
    %26 = vector.extract_strided_slice %5 {offsets = [24, 0], sizes = [8, 512], strides = [1, 1]} : vector<32x512xf32> to vector<8x512xf32>
    %27 = arith.select %24, %25, %26 : vector<8x512xi1>, vector<8x512xf32>
    %28 = vector.extract_strided_slice %5 {offsets = [8, 0], sizes = [8, 512], strides = [1, 1]} : vector<32x512xf32> to vector<8x512xf32>
    %29 = vector.extract_strided_slice %5 {offsets = [16, 0], sizes = [8, 512], strides = [1, 1]} : vector<32x512xf32> to vector<8x512xf32>
    %30 = arith.select %24, %28, %29 : vector<8x512xi1>, vector<8x512xf32>
    %31 = vector.extract_strided_slice %5 {offsets = [16, 0], sizes = [8, 512], strides = [1, 1]} : vector<32x512xf32> to vector<8x512xf32>
    %32 = vector.extract_strided_slice %5 {offsets = [8, 0], sizes = [8, 512], strides = [1, 1]} : vector<32x512xf32> to vector<8x512xf32>
    %33 = arith.select %24, %31, %32 : vector<8x512xi1>, vector<8x512xf32>
    %34 = vector.extract_strided_slice %5 {offsets = [24, 0], sizes = [8, 512], strides = [1, 1]} : vector<32x512xf32> to vector<8x512xf32>
    %35 = vector.extract_strided_slice %5 {offsets = [0, 0], sizes = [8, 512], strides = [1, 1]} : vector<32x512xf32> to vector<8x512xf32>
    %36 = arith.select %24, %34, %35 : vector<8x512xi1>, vector<8x512xf32>
    %c0_8 = arith.constant 0 : index
    %c0_9 = arith.constant 0 : index
    %37 = vector.load %arg2[%c0_8, %c0_9] : memref<64x512xf32, #tpu.memory_space<vmem>>, vector<64x512xf32>
    %cst_10 = arith.constant 0.000000e+00 : f32
    %38 = vector.broadcast %cst_10 : f32 to vector<8x64xf32>
    %cst_11 = arith.constant 0.000000e+00 : f32
    %39 = vector.broadcast %cst_11 : f32 to vector<8x64xf32>
    %cst_12 = arith.constant dense<0.000000e+00> : vector<8x512xf32>
    %40 = tpu.matmul %38, %37, %cst_12 {dimension_numbers = #tpu.dot_dimension_numbers<[1], [0], [0], [1], [0, 0, 1, 1], [], []>} : vector<8x64xf32>, vector<64x512xf32>, vector<8x512xf32> -> vector<8x512xf32>
    %41 = arith.addf %27, %40 : vector<8x512xf32>
    %42 = arith.negf %41 : vector<8x512xf32>
    %43 = math.exp %42 : vector<8x512xf32>
    %cst_13 = arith.constant 1.000000e+00 : f32
    %44 = vector.broadcast %cst_13 : f32 to vector<8x512xf32>
    %45 = arith.addf %44, %43 : vector<8x512xf32>
    %46 = arith.divf %44, %45 : vector<8x512xf32>
    %47 = vector.extract_strided_slice %46 {offsets = [0, 0], sizes = [8, 64], strides = [1, 1]} : vector<8x512xf32> to vector<8x64xf32>
    %48 = vector.extract_strided_slice %46 {offsets = [0, 128], sizes = [8, 64], strides = [1, 1]} : vector<8x512xf32> to vector<8x64xf32>
    %49 = vector.extract_strided_slice %46 {offsets = [0, 256], sizes = [8, 64], strides = [1, 1]} : vector<8x512xf32> to vector<8x64xf32>
    %50 = vector.extract_strided_slice %46 {offsets = [0, 384], sizes = [8, 64], strides = [1, 1]} : vector<8x512xf32> to vector<8x64xf32>
    %cst_14 = arith.constant 2.000000e+00 : f32
    %51 = vector.broadcast %cst_14 : f32 to vector<8x64xf32>
    %52 = arith.mulf %51, %50 : vector<8x64xf32>
    %cst_15 = arith.constant 1.000000e+00 : f32
    %53 = vector.broadcast %cst_15 : f32 to vector<8x64xf32>
    %54 = arith.subf %52, %53 : vector<8x64xf32>
    %55 = arith.mulf %48, %39 : vector<8x64xf32>
    %56 = arith.mulf %47, %54 : vector<8x64xf32>
    %57 = arith.addf %55, %56 : vector<8x64xf32>
    %58 = math.tanh %57 : vector<8x64xf32>
    %59 = arith.mulf %49, %58 : vector<8x64xf32>
    %cst_16 = arith.constant dense<0.000000e+00> : vector<8x512xf32>
    %60 = tpu.matmul %59, %37, %cst_16 {dimension_numbers = #tpu.dot_dimension_numbers<[1], [0], [0], [1], [0, 0, 1, 1], [], []>} : vector<8x64xf32>, vector<64x512xf32>, vector<8x512xf32> -> vector<8x512xf32>
    %61 = arith.addf %30, %60 : vector<8x512xf32>
    %62 = arith.negf %61 : vector<8x512xf32>
    %63 = math.exp %62 : vector<8x512xf32>
    %cst_17 = arith.constant 1.000000e+00 : f32
    %64 = vector.broadcast %cst_17 : f32 to vector<8x512xf32>
    %65 = arith.addf %64, %63 : vector<8x512xf32>
    %66 = arith.divf %64, %65 : vector<8x512xf32>
    %67 = vector.extract_strided_slice %66 {offsets = [0, 0], sizes = [8, 64], strides = [1, 1]} : vector<8x512xf32> to vector<8x64xf32>
    %68 = vector.extract_strided_slice %66 {offsets = [0, 128], sizes = [8, 64], strides = [1, 1]} : vector<8x512xf32> to vector<8x64xf32>
    %69 = vector.extract_strided_slice %66 {offsets = [0, 256], sizes = [8, 64], strides = [1, 1]} : vector<8x512xf32> to vector<8x64xf32>
    %70 = vector.extract_strided_slice %66 {offsets = [0, 384], sizes = [8, 64], strides = [1, 1]} : vector<8x512xf32> to vector<8x64xf32>
    %cst_18 = arith.constant 2.000000e+00 : f32
    %71 = vector.broadcast %cst_18 : f32 to vector<8x64xf32>
    %72 = arith.mulf %71, %70 : vector<8x64xf32>
    %cst_19 = arith.constant 1.000000e+00 : f32
    %73 = vector.broadcast %cst_19 : f32 to vector<8x64xf32>
    %74 = arith.subf %72, %73 : vector<8x64xf32>
    %75 = arith.mulf %68, %57 : vector<8x64xf32>
    %76 = arith.mulf %67, %74 : vector<8x64xf32>
    %77 = arith.addf %75, %76 : vector<8x64xf32>
    %78 = math.tanh %77 : vector<8x64xf32>
    %79 = arith.mulf %69, %78 : vector<8x64xf32>
    %cst_20 = arith.constant dense<0.000000e+00> : vector<8x512xf32>
    %80 = tpu.matmul %79, %37, %cst_20 {dimension_numbers = #tpu.dot_dimension_numbers<[1], [0], [0], [1], [0, 0, 1, 1], [], []>} : vector<8x64xf32>, vector<64x512xf32>, vector<8x512xf32> -> vector<8x512xf32>
    %81 = arith.addf %33, %80 : vector<8x512xf32>
    %82 = arith.negf %81 : vector<8x512xf32>
    %83 = math.exp %82 : vector<8x512xf32>
    %cst_21 = arith.constant 1.000000e+00 : f32
    %84 = vector.broadcast %cst_21 : f32 to vector<8x512xf32>
    %85 = arith.addf %84, %83 : vector<8x512xf32>
    %86 = arith.divf %84, %85 : vector<8x512xf32>
    %87 = vector.extract_strided_slice %86 {offsets = [0, 0], sizes = [8, 64], strides = [1, 1]} : vector<8x512xf32> to vector<8x64xf32>
    %88 = vector.extract_strided_slice %86 {offsets = [0, 128], sizes = [8, 64], strides = [1, 1]} : vector<8x512xf32> to vector<8x64xf32>
    %89 = vector.extract_strided_slice %86 {offsets = [0, 256], sizes = [8, 64], strides = [1, 1]} : vector<8x512xf32> to vector<8x64xf32>
    %90 = vector.extract_strided_slice %86 {offsets = [0, 384], sizes = [8, 64], strides = [1, 1]} : vector<8x512xf32> to vector<8x64xf32>
    %cst_22 = arith.constant 2.000000e+00 : f32
    %91 = vector.broadcast %cst_22 : f32 to vector<8x64xf32>
    %92 = arith.mulf %91, %90 : vector<8x64xf32>
    %cst_23 = arith.constant 1.000000e+00 : f32
    %93 = vector.broadcast %cst_23 : f32 to vector<8x64xf32>
    %94 = arith.subf %92, %93 : vector<8x64xf32>
    %95 = arith.mulf %88, %77 : vector<8x64xf32>
    %96 = arith.mulf %87, %94 : vector<8x64xf32>
    %97 = arith.addf %95, %96 : vector<8x64xf32>
    %98 = math.tanh %97 : vector<8x64xf32>
    %99 = arith.mulf %89, %98 : vector<8x64xf32>
    %cst_24 = arith.constant dense<0.000000e+00> : vector<8x512xf32>
    %100 = tpu.matmul %99, %37, %cst_24 {dimension_numbers = #tpu.dot_dimension_numbers<[1], [0], [0], [1], [0, 0, 1, 1], [], []>} : vector<8x64xf32>, vector<64x512xf32>, vector<8x512xf32> -> vector<8x512xf32>
    %101 = arith.addf %36, %100 : vector<8x512xf32>
    %102 = arith.negf %101 : vector<8x512xf32>
    %103 = math.exp %102 : vector<8x512xf32>
    %cst_25 = arith.constant 1.000000e+00 : f32
    %104 = vector.broadcast %cst_25 : f32 to vector<8x512xf32>
    %105 = arith.addf %104, %103 : vector<8x512xf32>
    %106 = arith.divf %104, %105 : vector<8x512xf32>
    %107 = vector.extract_strided_slice %106 {offsets = [0, 0], sizes = [8, 64], strides = [1, 1]} : vector<8x512xf32> to vector<8x64xf32>
    %108 = vector.extract_strided_slice %106 {offsets = [0, 128], sizes = [8, 64], strides = [1, 1]} : vector<8x512xf32> to vector<8x64xf32>
    %109 = vector.extract_strided_slice %106 {offsets = [0, 256], sizes = [8, 64], strides = [1, 1]} : vector<8x512xf32> to vector<8x64xf32>
    %110 = vector.extract_strided_slice %106 {offsets = [0, 384], sizes = [8, 64], strides = [1, 1]} : vector<8x512xf32> to vector<8x64xf32>
    %cst_26 = arith.constant 2.000000e+00 : f32
    %111 = vector.broadcast %cst_26 : f32 to vector<8x64xf32>
    %112 = arith.mulf %111, %110 : vector<8x64xf32>
    %cst_27 = arith.constant 1.000000e+00 : f32
    %113 = vector.broadcast %cst_27 : f32 to vector<8x64xf32>
    %114 = arith.subf %112, %113 : vector<8x64xf32>
    %115 = arith.mulf %108, %97 : vector<8x64xf32>
    %116 = arith.mulf %107, %114 : vector<8x64xf32>
    %117 = arith.addf %115, %116 : vector<8x64xf32>
    %118 = math.tanh %117 : vector<8x64xf32>
    %119 = arith.mulf %109, %118 : vector<8x64xf32>
    %120 = tpu.iota {dimensions = array<i32: 1>} : vector<8x64xi32>
    %c32_i32_28 = arith.constant 32 : i32
    %121 = vector.broadcast %c32_i32_28 : i32 to vector<8x64xi32>
    %122 = arith.cmpi slt, %120, %121 : vector<8x64xi32>
    %123 = arith.select %122, %59, %119 : vector<8x64xi1>, vector<8x64xf32>
    %124 = arith.select %122, %79, %99 : vector<8x64xi1>, vector<8x64xf32>
    %125 = arith.select %122, %99, %79 : vector<8x64xi1>, vector<8x64xf32>
    %126 = arith.select %122, %119, %59 : vector<8x64xi1>, vector<8x64xf32>
    %127 = tpu.concatenate %123, %124, %125, %126 in 0 : vector<8x64xf32>, vector<8x64xf32>, vector<8x64xf32>, vector<8x64xf32> -> vector<32x64xf32>
    %c0_29 = arith.constant 0 : index
    %c0_30 = arith.constant 0 : index
    %128 = vector.load %arg4[%c0_29, %c0_30] : memref<64x40xf32, #tpu.memory_space<vmem>>, vector<64x40xf32>
    %cst_31 = arith.constant dense<0.000000e+00> : vector<32x40xf32>
    %129 = tpu.matmul %127, %128, %cst_31 {dimension_numbers = #tpu.dot_dimension_numbers<[1], [0], [0], [1], [0, 0, 1, 1], [], []>} : vector<32x64xf32>, vector<64x40xf32>, vector<32x40xf32> -> vector<32x40xf32>
    %c0_32 = arith.constant 0 : index
    %c0_33 = arith.constant 0 : index
    %130 = vector.load %arg5[%c0_32, %c0_33] : memref<32x40xf32, #tpu.memory_space<vmem>>, vector<32x40xf32>
    %131 = arith.mulf %129, %130 : vector<32x40xf32>
    %c0_34 = arith.constant 0 : index
    %c0_35 = arith.constant 0 : index
    %132 = vector.load %arg6[%c0_34, %c0_35] : memref<40x5xf32, #tpu.memory_space<vmem>>, vector<40x5xf32>
    %cst_36 = arith.constant dense<0.000000e+00> : vector<32x5xf32>
    %133 = tpu.matmul %131, %132, %cst_36 {dimension_numbers = #tpu.dot_dimension_numbers<[1], [0], [0], [1], [0, 0, 1, 1], [], []>} : vector<32x40xf32>, vector<40x5xf32>, vector<32x5xf32> -> vector<32x5xf32>
    %c0_37 = arith.constant 0 : index
    %c0_38 = arith.constant 0 : index
    %134 = vector.load %arg7[%c0_37, %c0_38] : memref<4x32xf32, #tpu.memory_space<vmem>>, vector<4x32xf32>
    %cst_39 = arith.constant dense<0.000000e+00> : vector<4x5xf32>
    %135 = tpu.matmul %134, %133, %cst_39 {dimension_numbers = #tpu.dot_dimension_numbers<[1], [0], [0], [1], [0, 0, 1, 1], [], []>} : vector<4x32xf32>, vector<32x5xf32>, vector<4x5xf32> -> vector<4x5xf32>
    %c0_40 = arith.constant 0 : index
    %c0_41 = arith.constant 0 : index
    %136 = vector.load %arg8[%c0_40, %c0_41] : memref<1x5xf32, #tpu.memory_space<vmem>>, vector<1x5xf32>
    %137 = vector.broadcast %136 : vector<1x5xf32> to vector<4x5xf32>
    %138 = arith.addf %135, %137 : vector<4x5xf32>
    %c0_42 = arith.constant 0 : index
    %c0_43 = arith.constant 0 : index
    %139 = vector.load %arg9[%c0_42, %c0_43] : memref<4x5xf32, #tpu.memory_space<vmem>>, vector<4x5xf32>
    tpu.vector_store %arg9[%c0_42, %c0_43], %138 {strides = array<i32>} : memref<4x5xf32, #tpu.memory_space<vmem>>, vector<4x5xf32>,
    return
  }
}

</mosaic_0001>

<llo_original>
// kernel: tpu_custom_call.1
$region0: #{tpu_custom_call.1}
  #allocation0 [shape = 'u32[]', space=smem, size = 0x4, offset = 0x4, fixed_abs, tag = 'smem constant byte address 0x4 - core index']
  #allocation1 [shape = 'u32[144,128]{1,0:T(1,128)}', space=vmem, size = 0x12000, scoped, tag = 'internal scratch']
  %s0 = inlined_call_operand.vmem [shape: f32[32,16], index: 0, kind: input, shape index: {}]
  %s1 = inlined_call_operand.vmem [shape: f32[16,512], index: 1, kind: input, shape index: {}]
  %s2 = inlined_call_operand.hbm [shape: f32[64,512], index: 2, kind: input, shape index: {}]
  %s3 = inlined_call_operand.vmem [shape: f32[1,512], index: 3, kind: input, shape index: {}]
  %s4 = inlined_call_operand.vmem [shape: f32[64,40], index: 4, kind: input, shape index: {}]
  %s5 = inlined_call_operand.vmem [shape: f32[32,40], index: 5, kind: input, shape index: {}]
  %s6 = inlined_call_operand.vmem [shape: f32[40,5], index: 6, kind: input, shape index: {}]
  %s7 = inlined_call_operand.vmem [shape: f32[4,32], index: 7, kind: input, shape index: {}]
  %s8 = inlined_call_operand.vmem [shape: f32[1,5], index: 8, kind: input, shape index: {}]
  %s9 = inlined_call_operand.hbm [shape: f32[4,5], index: 9, kind: output, shape index: {}]
  %s10 = sld [smem:[#allocation0]]
  $region50: #{tpu_custom_call.1} parent=0
    _
  %s12 = ssub.s32 1, %s10
  %s13 = scalar_select 0, %s12, %s10
  $region1: #{tpu_custom_call.1} parent=0
    #allocation2 [shape = 'u8[131072]{0}', space=vmem, size = 0x20000, scoped, tag = 'input window, operand 2, single buffered']
    #allocation3 [shape = 's32[1]{0}', space=sflag, size = 0x4, scoped, tag = 'scoped memory for tpu_custom_call.1']
    #allocation4 [shape = 's32[1]{0}', space=sflag, size = 0x4, scoped, tag = 'scoped memory for tpu_custom_call.1']
    #allocation5 [shape = 'u8[2048]{0}', space=vmem, size = 0x800, scoped, tag = 'output window, operand 0, single buffered']
    %14 = vsyncpa [#allocation3], 0
    %15 = vsyncpa [#allocation4], 0
    // Predicated region
    $region2: #{tpu_custom_call.1} parent=1 // pred_check
      _
    $region3: #{tpu_custom_call.1} parent=1 // pred_check_branch
      %17 = sbr.rel (0) target = $region5
    $region4: #{tpu_custom_call.1} parent=1 // pred_region
      _
    $region5: #{tpu_custom_call.1} parent=1 // pred_fallthru
      _
    // Predicated region
    $region6: #{tpu_custom_call.1} parent=1 // pred_check
      _
    $region7: #{tpu_custom_call.1} parent=1 // pred_check_branch
      %19 = sbr.rel (0) target = $region9
    $region8: #{tpu_custom_call.1} parent=1 // pred_region
      _
    $region9: #{tpu_custom_call.1} parent=1 // pred_fallthru
      _
    // Predicated region
    $region10: #{tpu_custom_call.1} parent=1 // pred_check
      _
    $region11: #{tpu_custom_call.1} parent=1 // pred_check_branch
      %21 = sbr.rel (0) target = $region13
    $region12: #{tpu_custom_call.1} parent=1 // pred_region
      %s23 = ssub.s32 4096, 4096
      %24 = vsyncadd [#allocation3], %s23
      %s25 = sshll.u32 [#allocation2], 4
      %s26 = int_to_ptr.vmem [resolvable:$true] %s25
      %31 = dma.hbm_to_vmem [thread:$0]  %s2, 4096, %s26, [#allocation3], 512, 512, 32
    $region13: #{tpu_custom_call.1} parent=1 // pred_fallthru
      _
    // Predicated region
    $region14: #{tpu_custom_call.1} parent=1 // pred_check
      _
    $region15: #{tpu_custom_call.1} parent=1 // pred_check_branch
      %33 = sbr.rel (0) target = $region17
    $region16: #{tpu_custom_call.1} parent=1 // pred_region
      _
    $region17: #{tpu_custom_call.1} parent=1 // pred_fallthru
      _
    // Predicated region
    $region18: #{tpu_custom_call.1} parent=1 // pred_check
      _
    $region19: #{tpu_custom_call.1} parent=1 // pred_check_branch
      %35 = sbr.rel (0) target = $region21
    $region20: #{tpu_custom_call.1} parent=1 // pred_region
      _
    $region21: #{tpu_custom_call.1} parent=1 // pred_fallthru
      _
    // Predicated region
    $region22: #{tpu_custom_call.1} parent=1 // pred_check
      _
    $region23: #{tpu_custom_call.1} parent=1 // pred_check_branch
      %37 = sbr.rel (0) target = $region25
    $region24: #{tpu_custom_call.1} parent=1 // pred_region
      _
    $region25: #{tpu_custom_call.1} parent=1 // pred_fallthru
      _
    // Predicated region
    $region26: #{tpu_custom_call.1} parent=1 // pred_check
      _
    $region27: #{tpu_custom_call.1} parent=1 // pred_check_branch
      %39 = sbr.rel (0) target = $region29
    $region28: #{tpu_custom_call.1} parent=1 // pred_region
      _
    $region29: #{tpu_custom_call.1} parent=1 // pred_fallthru
      _
    // Predicated region
    $region30: #{tpu_custom_call.1} parent=1 // pred_check
      _
    $region31: #{tpu_custom_call.1} parent=1 // pred_check_branch
      %41 = sbr.rel (0) target = $region33
    $region32: #{tpu_custom_call.1} parent=1 // pred_region
      _
    $region33: #{tpu_custom_call.1} parent=1 // pred_fallthru
      _
    // Predicated region
    $region34: #{tpu_custom_call.1} parent=1 // pred_check
      _
    $region35: #{tpu_custom_call.1} parent=1 // pred_check_branch
      %43 = sbr.rel (0) target = $region37
    $region36: #{tpu_custom_call.1} parent=1 // pred_region
      _
    $region37: #{tpu_custom_call.1} parent=1 // pred_fallthru
      _
    // Predicated region
    $region38: #{tpu_custom_call.1} parent=1 // pred_check
      _
    $region39: #{tpu_custom_call.1} parent=1 // pred_check_branch
      %45 = sbr.rel (0) target = $region41
    $region40: #{tpu_custom_call.1} parent=1 // pred_region
      %46 = dma.done [#allocation3], 4096
    $region41: #{tpu_custom_call.1} parent=1 // pred_fallthru
      _
    %v47 = vld [vmem:[%s0] sm:$0xff]
    %v48 = vld [vmem:[%s0 + $0x8] sm:$0xff]
    %v49 = vld [vmem:[%s0 + $0x10] sm:$0xff]
    %v50 = vld [vmem:[%s0 + $0x18] sm:$0xff]
    %v51 = vld [vmem:[%s1] sm:$0xff]
    %v52 = vld [vmem:[%s1 + $0x8] sm:$0xff]
    %v53 = vld [vmem:[%s1 + $0x10] sm:$0xff]
    %v54 = vld [vmem:[%s1 + $0x18] sm:$0xff]
    %v55 = vld [vmem:[%s1 + $0x20] sm:$0xff]
    %v56 = vld [vmem:[%s1 + $0x28] sm:$0xff]
    %v57 = vld [vmem:[%s1 + $0x30] sm:$0xff]
    %v58 = vld [vmem:[%s1 + $0x38] sm:$0xff]
    %v59 = vld [vmem:[%s3] sm:$0xf]
    %v61 = vlaneseq
    %v62 = vshrl.u32 %v61, 7
    %v63 = vsub.s32 0, %v62
    %v64 = vrot.slane %v59, %v63
    %v65 = vlaneseq
    %v66 = vshrl.u32 %v65, 7
    %v67 = vsub.s32 1, %v66
    %v68 = vrot.slane %v59, %v67
    %v69 = vlaneseq
    %v70 = vshrl.u32 %v69, 7
    %v71 = vsub.s32 2, %v70
    %v72 = vrot.slane %v59, %v71
    %v73 = vlaneseq
    %v74 = vshrl.u32 %v73, 7
    %v75 = vsub.s32 3, %v74
    %v76 = vrot.slane %v59, %v75
    %vm81 = vcmask 130048
    %v83 = vsel %vm81, %v47, 0
    %v86 = vsel %vm81, %v48, 0
    %v89 = vsel %vm81, %v49, 0
    %v92 = vsel %vm81, %v50, 0
    %94 = vmatprep.subr.mxu0 0.0
    %95 = vmatpush1.msra.mxu0 0.0
    %96 = vmatprep.subr.mxu0 0.0
    %97 = vmatpush1.msra.mxu0 0.0
    %98 = vmatprep.subr.mxu0 0.0
    %99 = vmatpush1.msra.mxu0 0.0
    %100 = vmatprep.subr.mxu0 0.0
    %101 = vmatpush1.msra.mxu0 0.0
    %102 = vmatprep.subr.mxu0 0.0
    %103 = vmatpush1.msra.mxu0 0.0
    %104 = vmatprep.subr.mxu0 0.0
    %105 = vmatpush1.msra.mxu0 0.0
    %106 = vmatprep.subr.mxu0 0.0
    %107 = vmatpush1.msra.mxu0 0.0
    %108 = vmatprep.subr.mxu0 0.0
    %109 = vmatpush1.msra.mxu0 0.0
    %110 = vmatprep.subr.mxu0 0.0
    %111 = vmatpush1.msra.mxu0 0.0
    %112 = vmatprep.subr.mxu0 0.0
    %113 = vmatpush1.msra.mxu0 0.0
    %114 = vmatprep.subr.mxu0 0.0
    %115 = vmatpush1.msra.mxu0 0.0
    %116 = vmatprep.subr.mxu0 0.0
    %117 = vmatpush1.msra.mxu0 0.0
    %118 = vmatprep.subr.mxu0 0.0
    %119 = vmatpush1.msra.mxu0 0.0
    %120 = vmatprep.subr.mxu0 0.0
    %121 = vmatpush1.msra.mxu0 0.0
    %122 = vmatprep.subr.mxu0 %v56
    %123 = vmatpush1.msra.mxu0 %v55
    %124 = vmatprep.subr.mxu0 %v52
    %125 = vmatpush1.msra.mxu0 %v51
    %126 = vmatprep.subr.mxu0 0.0
    %127 = vmatpush2.msra.mxu0 0.0
    %128 = vmatprep.subr.mxu0 0.0
    %129 = vmatpush2.msra.mxu0 0.0
    %130 = vmatprep.subr.mxu0 0.0
    %131 = vmatpush2.msra.mxu0 0.0
    %132 = vmatprep.subr.mxu0 0.0
    %133 = vmatpush2.msra.mxu0 0.0
    %134 = vmatprep.subr.mxu0 0.0
    %135 = vmatpush2.msra.mxu0 0.0
    %136 = vmatprep.subr.mxu0 0.0
    %137 = vmatpush2.msra.mxu0 0.0
    %138 = vmatprep.subr.mxu0 0.0
    %139 = vmatpush2.msra.mxu0 0.0
    %140 = vmatprep.subr.mxu0 0.0
    %141 = vmatpush2.msra.mxu0 0.0
    %142 = vmatprep.subr.mxu0 0.0
    %143 = vmatpush2.msra.mxu0 0.0
    %144 = vmatprep.subr.mxu0 0.0
    %145 = vmatpush2.msra.mxu0 0.0
    %146 = vmatprep.subr.mxu0 0.0
    %147 = vmatpush2.msra.mxu0 0.0
    %148 = vmatprep.subr.mxu0 0.0
    %149 = vmatpush2.msra.mxu0 0.0
    %150 = vmatprep.subr.mxu0 0.0
    %151 = vmatpush2.msra.mxu0 0.0
    %152 = vmatprep.subr.mxu0 0.0
    %153 = vmatpush2.msra.mxu0 0.0
    %154 = vmatprep.subr.mxu0 0.0
    %155 = vmatpush2.msra.mxu0 0.0
    %156 = vmatprep.subr.mxu0 0.0
    %157 = vmatpush2.msra.mxu0 0.0
    %158 = vmatprep.mubr.f32.mxu0 0.0
    %159 = vmatmul.mubr.f32.gmra.mxu0 %v83
    %v160 = vpop.f32.mrf.mxu0
    %v161 = vadd.f32 %v64, %v160
    %v162 = vpop.f32.mrf.mxu0
    %v163 = vadd.f32 %v68, %v162
    %164 = vmatprep.mubr.f32.mxu0 0.0
    %165 = vmatmul.mubr.f32.gmra.mxu0 %v86
    %v166 = vpop.f32.mrf.mxu0
    %v167 = vadd.f32 %v64, %v166
    %v168 = vpop.f32.mrf.mxu0
    %v169 = vadd.f32 %v68, %v168
    %170 = vmatprep.mubr.f32.mxu0 0.0
    %171 = vmatmul.mubr.f32.gmra.mxu0 %v89
    %v172 = vpop.f32.mrf.mxu0
    %v173 = vadd.f32 %v64, %v172
    %v174 = vpop.f32.mrf.mxu0
    %v175 = vadd.f32 %v68, %v174
    %176 = vmatprep.mubr.f32.mxu0 0.0
    %177 = vmatmul.mubr.f32.gmra.mxu0 %v92
    %v178 = vpop.f32.mrf.mxu0
    %v179 = vadd.f32 %v64, %v178
    %v180 = vpop.f32.mrf.mxu0
    %v181 = vadd.f32 %v68, %v180
    %182 = vdwg.mxu0
    %183 = vmatprep.subr.mxu0 0.0
    %184 = vmatpush1.msra.mxu0 0.0
    %185 = vmatprep.subr.mxu0 0.0
    %186 = vmatpush1.msra.mxu0 0.0
    %187 = vmatprep.subr.mxu0 0.0
    %188 = vmatpush1.msra.mxu0 0.0
    %189 = vmatprep.subr.mxu0 0.0
    %190 = vmatpush1.msra.mxu0 0.0
    %191 = vmatprep.subr.mxu0 0.0
    %192 = vmatpush1.msra.mxu0 0.0
    %193 = vmatprep.subr.mxu0 0.0
    %194 = vmatpush1.msra.mxu0 0.0
    %195 = vmatprep.subr.mxu0 0.0
    %196 = vmatpush1.msra.mxu0 0.0
    %197 = vmatprep.subr.mxu0 0.0
    %198 = vmatpush1.msra.mxu0 0.0
    %199 = vmatprep.subr.mxu0 0.0
    %200 = vmatpush1.msra.mxu0 0.0
    %201 = vmatprep.subr.mxu0 0.0
    %202 = vmatpush1.msra.mxu0 0.0
    %203 = vmatprep.subr.mxu0 0.0
    %204 = vmatpush1.msra.mxu0 0.0
    %205 = vmatprep.subr.mxu0 0.0
    %206 = vmatpush1.msra.mxu0 0.0
    %207 = vmatprep.subr.mxu0 0.0
    %208 = vmatpush1.msra.mxu0 0.0
    %209 = vmatprep.subr.mxu0 0.0
    %210 = vmatpush1.msra.mxu0 0.0
    %211 = vmatprep.subr.mxu0 %v58
    %212 = vmatpush1.msra.mxu0 %v57
    %213 = vmatprep.subr.mxu0 %v54
    %214 = vmatpush1.msra.mxu0 %v53
    %215 = vmatprep.subr.mxu0 0.0
    %216 = vmatpush2.msra.mxu0 0.0
    %217 = vmatprep.subr.mxu0 0.0
    %218 = vmatpush2.msra.mxu0 0.0
    %219 = vmatprep.subr.mxu0 0.0
    %220 = vmatpush2.msra.mxu0 0.0
    %221 = vmatprep.subr.mxu0 0.0
    %222 = vmatpush2.msra.mxu0 0.0
    %223 = vmatprep.subr.mxu0 0.0
    %224 = vmatpush2.msra.mxu0 0.0
    %225 = vmatprep.subr.mxu0 0.0
    %226 = vmatpush2.msra.mxu0 0.0
    %227 = vmatprep.subr.mxu0 0.0
    %228 = vmatpush2.msra.mxu0 0.0
    %229 = vmatprep.subr.mxu0 0.0
    %230 = vmatpush2.msra.mxu0 0.0
    %231 = vmatprep.subr.mxu0 0.0
    %232 = vmatpush2.msra.mxu0 0.0
    %233 = vmatprep.subr.mxu0 0.0
    %234 = vmatpush2.msra.mxu0 0.0
    %235 = vmatprep.subr.mxu0 0.0
    %236 = vmatpush2.msra.mxu0 0.0
    %237 = vmatprep.subr.mxu0 0.0
    %238 = vmatpush2.msra.mxu0 0.0
    %239 = vmatprep.subr.mxu0 0.0
    %240 = vmatpush2.msra.mxu0 0.0
    %241 = vmatprep.subr.mxu0 0.0
    %242 = vmatpush2.msra.mxu0 0.0
    %243 = vmatprep.subr.mxu0 0.0
    %244 = vmatpush2.msra.mxu0 0.0
    %245 = vmatprep.subr.mxu0 0.0
    %246 = vmatpush2.msra.mxu0 0.0
    %247 = vmatprep.mubr.f32.mxu0 0.0
    %248 = vmatmul.mubr.f32.gmra.mxu0 %v83
    %v249 = vpop.f32.mrf.mxu0
    %v250 = vadd.f32 %v72, %v249
    %v251 = vpop.f32.mrf.mxu0
    %v252 = vadd.f32 %v76, %v251
    %253 = vmatprep.mubr.f32.mxu0 0.0
    %254 = vmatmul.mubr.f32.gmra.mxu0 %v86
    %v255 = vpop.f32.mrf.mxu0
    %v256 = vadd.f32 %v72, %v255
    %v257 = vpop.f32.mrf.mxu0
    %v258 = vadd.f32 %v76, %v257
    %259 = vmatprep.mubr.f32.mxu0 0.0
    %260 = vmatmul.mubr.f32.gmra.mxu0 %v89
    %v261 = vpop.f32.mrf.mxu0
    %v262 = vadd.f32 %v72, %v261
    %v263 = vpop.f32.mrf.mxu0
    %v264 = vadd.f32 %v76, %v263
    %265 = vmatprep.mubr.f32.mxu0 0.0
    %266 = vmatmul.mubr.f32.gmra.mxu0 %v92
    %v267 = vpop.f32.mrf.mxu0
    %v268 = vadd.f32 %v72, %v267
    %v269 = vpop.f32.mrf.mxu0
    %v270 = vadd.f32 %v76, %v269
    %271 = vdwg.mxu0
    %v272 = vlaneseq
    %v273 = vand.u32 %v272, 127
    %v274 = vadd.s32 %v273, 128
    %v275 = vadd.s32 %v273, 256
    %v276 = vadd.s32 %v273, 384
    %vm277 = vcmp.lt.s32.totalorder %v273, 0
    %v278 = vsub.s32 0, %v273
    %v279 = vsel %vm277, %v278, %v273
    %v280 = vshrl.u32 %v279, 7
    %v281 = vand.u32 %v279, 127
    %v282 = vsub.s32 0, %v281
    %v283 = vsel %vm277, %v282, %v281
    %vm284 = vcmp.lt.s32.totalorder %v274, 0
    %v285 = vsub.s32 0, %v274
    %v286 = vsel %vm284, %v285, %v274
    %v287 = vshrl.u32 %v286, 7
    %v288 = vand.u32 %v286, 127
    %v289 = vsub.s32 0, %v288
    %v290 = vsel %vm284, %v289, %v288
    %vm291 = vcmp.lt.s32.totalorder %v275, 0
    %v292 = vsub.s32 0, %v275
    %v293 = vsel %vm291, %v292, %v275
    %v294 = vshrl.u32 %v293, 7
    %v295 = vand.u32 %v293, 127
    %v296 = vsub.s32 0, %v295
    %v297 = vsel %vm291, %v296, %v295
    %vm298 = vcmp.lt.s32.totalorder %v276, 0
    %v299 = vsub.s32 0, %v276
    %v300 = vsel %vm298, %v299, %v276
    %v301 = vshrl.u32 %v300, 7
    %v302 = vand.u32 %v300, 127
    %v303 = vsub.s32 0, %v302
    %v304 = vsel %vm298, %v303, %v302
    %vm305 = vcmp.ne.s32.totalorder %v283, 0
    %vm306 = vcmp.ne.s32.totalorder %v290, 0
    %vm307 = vcmp.ne.s32.totalorder %v297, 0
    %vm308 = vcmp.ne.s32.totalorder %v304, 0
    %vm309 = vcmp.lt.s32.totalorder %v283, 0
    %vm310 = vcmp.lt.s32.totalorder %v290, 0
    %vm311 = vcmp.lt.s32.totalorder %v297, 0
    %vm312 = vcmp.lt.s32.totalorder %v304, 0
    %vm313 = vmand %vm309, %vm305
    %vm314 = vmand %vm310, %vm306
    %vm315 = vmand %vm311, %vm307
    %vm316 = vmand %vm312, %vm308
    %v317 = vadd.s32 %v283, 128
    %v318 = vadd.s32 %v290, 128
    %v319 = vadd.s32 %v297, 128
    %v320 = vadd.s32 %v304, 128
    %v321 = vsel %vm313, %v317, %v283
    %v322 = vsel %vm314, %v318, %v290
    %v323 = vsel %vm315, %v319, %v297
    %v324 = vsel %vm316, %v320, %v304
    %vm325 = vcmp.lt.s32.totalorder %v321, 32
    %vm326 = vcmp.lt.s32.totalorder %v322, 32
    %vm327 = vcmp.lt.s32.totalorder %v323, 32
    %vm328 = vcmp.lt.s32.totalorder %v324, 32
    %v329 = vsel %vm325, %v161, %v179
    %v330 = vsel %vm326, %v163, %v181
    %v331 = vsel %vm327, %v250, %v268
    %v332 = vsel %vm328, %v252, %v270
    %v333 = vsel %vm325, %v167, %v173
    %v334 = vsel %vm326, %v169, %v175
    %v335 = vsel %vm327, %v256, %v262
    %v336 = vsel %vm328, %v258, %v264
    %v337 = vsel %vm325, %v173, %v167
    %v338 = vsel %vm326, %v175, %v169
    %v339 = vsel %vm327, %v262, %v256
    %v340 = vsel %vm328, %v264, %v258
    %v341 = vsel %vm325, %v179, %v161
    %v342 = vsel %vm326, %v181, %v163
    %v343 = vsel %vm327, %v268, %v250
    %v344 = vsel %vm328, %v270, %v252
    %v345 = vld [vmem:[#allocation2] sm:$0xff]
    %v346 = vld [vmem:[#allocation2 + $0x8] sm:$0xff]
    %v347 = vld [vmem:[#allocation2 + $0x10] sm:$0xff]
    %v348 = vld [vmem:[#allocation2 + $0x18] sm:$0xff]
    %v349 = vld [vmem:[#allocation2 + $0x20] sm:$0xff]
    %v350 = vld [vmem:[#allocation2 + $0x28] sm:$0xff]
    %v351 = vld [vmem:[#allocation2 + $0x30] sm:$0xff]
    %v352 = vld [vmem:[#allocation2 + $0x38] sm:$0xff]
    %v353 = vld [vmem:[#allocation2 + $0x40] sm:$0xff]
    %v354 = vld [vmem:[#allocation2 + $0x48] sm:$0xff]
    %v355 = vld [vmem:[#allocation2 + $0x50] sm:$0xff]
    %v356 = vld [vmem:[#allocation2 + $0x58] sm:$0xff]
    %v357 = vld [vmem:[#allocation2 + $0x60] sm:$0xff]
    %v358 = vld [vmem:[#allocation2 + $0x68] sm:$0xff]
    %v359 = vld [vmem:[#allocation2 + $0x70] sm:$0xff]
    %v360 = vld [vmem:[#allocation2 + $0x78] sm:$0xff]
    %v361 = vld [vmem:[#allocation2 + $0x80] sm:$0xff]
    %v362 = vld [vmem:[#allocation2 + $0x88] sm:$0xff]
    %v363 = vld [vmem:[#allocation2 + $0x90] sm:$0xff]
    %v364 = vld [vmem:[#allocation2 + $0x98] sm:$0xff]
    %v365 = vld [vmem:[#allocation2 + $0xa0] sm:$0xff]
    %v366 = vld [vmem:[#allocation2 + $0xa8] sm:$0xff]
    %v367 = vld [vmem:[#allocation2 + $0xb0] sm:$0xff]
    %v368 = vld [vmem:[#allocation2 + $0xb8] sm:$0xff]
    %v369 = vld [vmem:[#allocation2 + $0xc0] sm:$0xff]
    %v370 = vld [vmem:[#allocation2 + $0xc8] sm:$0xff]
    %v371 = vld [vmem:[#allocation2 + $0xd0] sm:$0xff]
    %v372 = vld [vmem:[#allocation2 + $0xd8] sm:$0xff]
    %v373 = vld [vmem:[#allocation2 + $0xe0] sm:$0xff]
    %v374 = vld [vmem:[#allocation2 + $0xe8] sm:$0xff]
    %v375 = vld [vmem:[#allocation2 + $0xf0] sm:$0xff]
    %v376 = vld [vmem:[#allocation2 + $0xf8] sm:$0xff]
    %vm377 = vcmask 523264
    %v379 = vsel %vm377, 0.0, 0
    %381 = vmatprep.subr.mxu0 0.0
    %382 = vmatpush1.msra.mxu0 0.0
    %383 = vmatprep.subr.mxu0 0.0
    %384 = vmatpush1.msra.mxu0 0.0
    %385 = vmatprep.subr.mxu0 0.0
    %386 = vmatpush1.msra.mxu0 0.0
    %387 = vmatprep.subr.mxu0 0.0
    %388 = vmatpush1.msra.mxu0 0.0
    %389 = vmatprep.subr.mxu0 0.0
    %390 = vmatpush1.msra.mxu0 0.0
    %391 = vmatprep.subr.mxu0 0.0
    %392 = vmatpush1.msra.mxu0 0.0
    %393 = vmatprep.subr.mxu0 0.0
    %394 = vmatpush1.msra.mxu0 0.0
    %395 = vmatprep.subr.mxu0 0.0
    %396 = vmatpush1.msra.mxu0 0.0
    %397 = vmatprep.subr.mxu0 %v374
    %398 = vmatpush1.msra.mxu0 %v373
    %399 = vmatprep.subr.mxu0 %v370
    %400 = vmatpush1.msra.mxu0 %v369
    %401 = vmatprep.subr.mxu0 %v366
    %402 = vmatpush1.msra.mxu0 %v365
    %403 = vmatprep.subr.mxu0 %v362
    %404 = vmatpush1.msra.mxu0 %v361
    %405 = vmatprep.subr.mxu0 %v358
    %406 = vmatpush1.msra.mxu0 %v357
    %407 = vmatprep.subr.mxu0 %v354
    %408 = vmatpush1.msra.mxu0 %v353
    %409 = vmatprep.subr.mxu0 %v350
    %410 = vmatpush1.msra.mxu0 %v349
    %411 = vmatprep.subr.mxu0 %v346
    %412 = vmatpush1.msra.mxu0 %v345
    %413 = vmatprep.subr.mxu0 0.0
    %414 = vmatpush2.msra.mxu0 0.0
    %415 = vmatprep.subr.mxu0 0.0
    %416 = vmatpush2.msra.mxu0 0.0
    %417 = vmatprep.subr.mxu0 0.0
    %418 = vmatpush2.msra.mxu0 0.0
    %419 = vmatprep.subr.mxu0 0.0
    %420 = vmatpush2.msra.mxu0 0.0
    %421 = vmatprep.subr.mxu0 0.0
    %422 = vmatpush2.msra.mxu0 0.0
    %423 = vmatprep.subr.mxu0 0.0
    %424 = vmatpush2.msra.mxu0 0.0
    %425 = vmatprep.subr.mxu0 0.0
    %426 = vmatpush2.msra.mxu0 0.0
    %427 = vmatprep.subr.mxu0 0.0
    %428 = vmatpush2.msra.mxu0 0.0
    %429 = vmatprep.subr.mxu0 0.0
    %430 = vmatpush2.msra.mxu0 0.0
    %431 = vmatprep.subr.mxu0 0.0
    %432 = vmatpush2.msra.mxu0 0.0
    %433 = vmatprep.subr.mxu0 0.0
    %434 = vmatpush2.msra.mxu0 0.0
    %435 = vmatprep.subr.mxu0 0.0
    %436 = vmatpush2.msra.mxu0 0.0
    %437 = vmatprep.subr.mxu0 0.0
    %438 = vmatpush2.msra.mxu0 0.0
    %439 = vmatprep.subr.mxu0 0.0
    %440 = vmatpush2.msra.mxu0 0.0
    %441 = vmatprep.subr.mxu0 0.0
    %442 = vmatpush2.msra.mxu0 0.0
    %443 = vmatprep.subr.mxu0 0.0
    %444 = vmatpush2.msra.mxu0 0.0
    %445 = vmatprep.mubr.f32.mxu0 0.0
    %446 = vmatmul.mubr.f32.gmra.mxu0 %v379
    %v447 = vpop.f32.mrf.mxu0
    %v448 = vadd.f32 0.0, %v447
    %v449 = vpop.f32.mrf.mxu0
    %v450 = vadd.f32 0.0, %v449
    %451 = vdwg.mxu0
    %452 = vmatprep.subr.mxu0 0.0
    %453 = vmatpush1.msra.mxu0 0.0
    %454 = vmatprep.subr.mxu0 0.0
    %455 = vmatpush1.msra.mxu0 0.0
    %456 = vmatprep.subr.mxu0 0.0
    %457 = vmatpush1.msra.mxu0 0.0
    %458 = vmatprep.subr.mxu0 0.0
    %459 = vmatpush1.msra.mxu0 0.0
    %460 = vmatprep.subr.mxu0 0.0
    %461 = vmatpush1.msra.mxu0 0.0
    %462 = vmatprep.subr.mxu0 0.0
    %463 = vmatpush1.msra.mxu0 0.0
    %464 = vmatprep.subr.mxu0 0.0
    %465 = vmatpush1.msra.mxu0 0.0
    %466 = vmatprep.subr.mxu0 0.0
    %467 = vmatpush1.msra.mxu0 0.0
    %468 = vmatprep.subr.mxu0 %v376
    %469 = vmatpush1.msra.mxu0 %v375
    %470 = vmatprep.subr.mxu0 %v372
    %471 = vmatpush1.msra.mxu0 %v371
    %472 = vmatprep.subr.mxu0 %v368
    %473 = vmatpush1.msra.mxu0 %v367
    %474 = vmatprep.subr.mxu0 %v364
    %475 = vmatpush1.msra.mxu0 %v363
    %476 = vmatprep.subr.mxu0 %v360
    %477 = vmatpush1.msra.mxu0 %v359
    %478 = vmatprep.subr.mxu0 %v356
    %479 = vmatpush1.msra.mxu0 %v355
    %480 = vmatprep.subr.mxu0 %v352
    %481 = vmatpush1.msra.mxu0 %v351
    %482 = vmatprep.subr.mxu0 %v348
    %483 = vmatpush1.msra.mxu0 %v347
    %484 = vmatprep.subr.mxu0 0.0
    %485 = vmatpush2.msra.mxu0 0.0
    %486 = vmatprep.subr.mxu0 0.0
    %487 = vmatpush2.msra.mxu0 0.0
    %488 = vmatprep.subr.mxu0 0.0
    %489 = vmatpush2.msra.mxu0 0.0
    %490 = vmatprep.subr.mxu0 0.0
    %491 = vmatpush2.msra.mxu0 0.0
    %492 = vmatprep.subr.mxu0 0.0
    %493 = vmatpush2.msra.mxu0 0.0
    %494 = vmatprep.subr.mxu0 0.0
    %495 = vmatpush2.msra.mxu0 0.0
    %496 = vmatprep.subr.mxu0 0.0
    %497 = vmatpush2.msra.mxu0 0.0
    %498 = vmatprep.subr.mxu0 0.0
    %499 = vmatpush2.msra.mxu0 0.0
    %500 = vmatprep.subr.mxu0 0.0
    %501 = vmatpush2.msra.mxu0 0.0
    %502 = vmatprep.subr.mxu0 0.0
    %503 = vmatpush2.msra.mxu0 0.0
    %504 = vmatprep.subr.mxu0 0.0
    %505 = vmatpush2.msra.mxu0 0.0
    %506 = vmatprep.subr.mxu0 0.0
    %507 = vmatpush2.msra.mxu0 0.0
    %508 = vmatprep.subr.mxu0 0.0
    %509 = vmatpush2.msra.mxu0 0.0
    %510 = vmatprep.subr.mxu0 0.0
    %511 = vmatpush2.msra.mxu0 0.0
    %512 = vmatprep.subr.mxu0 0.0
    %513 = vmatpush2.msra.mxu0 0.0
    %514 = vmatprep.subr.mxu0 0.0
    %515 = vmatpush2.msra.mxu0 0.0
    %516 = vmatprep.mubr.f32.mxu0 0.0
    %517 = vmatmul.mubr.f32.gmra.mxu0 %v379
    %v518 = vpop.f32.mrf.mxu0
    %v519 = vadd.f32 0.0, %v518
    %v520 = vpop.f32.mrf.mxu0
    %v521 = vadd.f32 0.0, %v520
    %522 = vdwg.mxu0
    %v523 = vadd.f32 %v329, %v448
    %v524 = vadd.f32 %v330, %v450
    %v525 = vadd.f32 %v331, %v519
    %v526 = vadd.f32 %v332, %v521
    %v527 = vxor.u32 %v523, 2147483648
    %v528 = vxor.u32 %v524, 2147483648
    %v529 = vxor.u32 %v525, 2147483648
    %v530 = vxor.u32 %v526, 2147483648
    %v531 = vmul.f32 %v527, 1.442695
    %v532 = vpow.pop %v531
    %v533 = vmul.f32 %v528, 1.442695
    %v534 = vpow.pop %v533
    %v535 = vmul.f32 %v529, 1.442695
    %v536 = vpow.pop %v535
    %v537 = vmul.f32 %v530, 1.442695
    %v538 = vpow.pop %v537
    %v539 = vadd.f32 %v532, 1.0
    %v540 = vadd.f32 %v534, 1.0
    %v541 = vadd.f32 %v536, 1.0
    %v542 = vadd.f32 %v538, 1.0
    %v543 = vrcp.pop %v539
    %v544 = vmul.f32 1.0, %v543
    %v545 = vrcp.pop %v540
    %v546 = vmul.f32 1.0, %v545
    %v547 = vrcp.pop %v541
    %v548 = vmul.f32 1.0, %v547
    %v549 = vrcp.pop %v542
    %v550 = vmul.f32 1.0, %v549
    %v551 = vmul.f32 %v550, 2.0
    %v552 = vsub.f32 %v551, 1.0
    %v553 = vmul.f32 %v546, 0.0
    %v554 = vmul.f32 %v544, %v552
    %v555 = vadd.f32 %v553, %v554
    %v556 = vtanh.pop %v555
    %v557 = vmul.f32 %v548, %v556
    %v559 = vsel %vm377, %v557, 0
    %561 = vmatprep.subr.mxu0 0.0
    %562 = vmatpush1.msra.mxu0 0.0
    %563 = vmatprep.subr.mxu0 0.0
    %564 = vmatpush1.msra.mxu0 0.0
    %565 = vmatprep.subr.mxu0 0.0
    %566 = vmatpush1.msra.mxu0 0.0
    %567 = vmatprep.subr.mxu0 0.0
    %568 = vmatpush1.msra.mxu0 0.0
    %569 = vmatprep.subr.mxu0 0.0
    %570 = vmatpush1.msra.mxu0 0.0
    %571 = vmatprep.subr.mxu0 0.0
    %572 = vmatpush1.msra.mxu0 0.0
    %573 = vmatprep.subr.mxu0 0.0
    %574 = vmatpush1.msra.mxu0 0.0
    %575 = vmatprep.subr.mxu0 0.0
    %576 = vmatpush1.msra.mxu0 0.0
    %577 = vmatprep.subr.mxu0 %v374
    %578 = vmatpush1.msra.mxu0 %v373
    %579 = vmatprep.subr.mxu0 %v370
    %580 = vmatpush1.msra.mxu0 %v369
    %581 = vmatprep.subr.mxu0 %v366
    %582 = vmatpush1.msra.mxu0 %v365
    %583 = vmatprep.subr.mxu0 %v362
    %584 = vmatpush1.msra.mxu0 %v361
    %585 = vmatprep.subr.mxu0 %v358
    %586 = vmatpush1.msra.mxu0 %v357
    %587 = vmatprep.subr.mxu0 %v354
    %588 = vmatpush1.msra.mxu0 %v353
    %589 = vmatprep.subr.mxu0 %v350
    %590 = vmatpush1.msra.mxu0 %v349
    %591 = vmatprep.subr.mxu0 %v346
    %592 = vmatpush1.msra.mxu0 %v345
    %593 = vmatprep.subr.mxu0 0.0
    %594 = vmatpush2.msra.mxu0 0.0
    %595 = vmatprep.subr.mxu0 0.0
    %596 = vmatpush2.msra.mxu0 0.0
    %597 = vmatprep.subr.mxu0 0.0
    %598 = vmatpush2.msra.mxu0 0.0
    %599 = vmatprep.subr.mxu0 0.0
    %600 = vmatpush2.msra.mxu0 0.0
    %601 = vmatprep.subr.mxu0 0.0
    %602 = vmatpush2.msra.mxu0 0.0
    %603 = vmatprep.subr.mxu0 0.0
    %604 = vmatpush2.msra.mxu0 0.0
    %605 = vmatprep.subr.mxu0 0.0
    %606 = vmatpush2.msra.mxu0 0.0
    %607 = vmatprep.subr.mxu0 0.0
    %608 = vmatpush2.msra.mxu0 0.0
    %609 = vmatprep.subr.mxu0 0.0
    %610 = vmatpush2.msra.mxu0 0.0
    %611 = vmatprep.subr.mxu0 0.0
    %612 = vmatpush2.msra.mxu0 0.0
    %613 = vmatprep.subr.mxu0 0.0
    %614 = vmatpush2.msra.mxu0 0.0
    %615 = vmatprep.subr.mxu0 0.0
    %616 = vmatpush2.msra.mxu0 0.0
    %617 = vmatprep.subr.mxu0 0.0
    %618 = vmatpush2.msra.mxu0 0.0
    %619 = vmatprep.subr.mxu0 0.0
    %620 = vmatpush2.msra.mxu0 0.0
    %621 = vmatprep.subr.mxu0 0.0
    %622 = vmatpush2.msra.mxu0 0.0
    %623 = vmatprep.subr.mxu0 0.0
    %624 = vmatpush2.msra.mxu0 0.0
    %625 = vmatprep.mubr.f32.mxu0 0.0
    %626 = vmatmul.mubr.f32.gmra.mxu0 %v559
    %v627 = vpop.f32.mrf.mxu0
    %v628 = vadd.f32 0.0, %v627
    %v629 = vpop.f32.mrf.mxu0
    %v630 = vadd.f32 0.0, %v629
    %631 = vdwg.mxu0
    %632 = vmatprep.subr.mxu0 0.0
    %633 = vmatpush1.msra.mxu0 0.0
    %634 = vmatprep.subr.mxu0 0.0
    %635 = vmatpush1.msra.mxu0 0.0
    %636 = vmatprep.subr.mxu0 0.0
    %637 = vmatpush1.msra.mxu0 0.0
    %638 = vmatprep.subr.mxu0 0.0
    %639 = vmatpush1.msra.mxu0 0.0
    %640 = vmatprep.subr.mxu0 0.0
    %641 = vmatpush1.msra.mxu0 0.0
    %642 = vmatprep.subr.mxu0 0.0
    %643 = vmatpush1.msra.mxu0 0.0
    %644 = vmatprep.subr.mxu0 0.0
    %645 = vmatpush1.msra.mxu0 0.0
    %646 = vmatprep.subr.mxu0 0.0
    %647 = vmatpush1.msra.mxu0 0.0
    %648 = vmatprep.subr.mxu0 %v376
    %649 = vmatpush1.msra.mxu0 %v375
    %650 = vmatprep.subr.mxu0 %v372
    %651 = vmatpush1.msra.mxu0 %v371
    %652 = vmatprep.subr.mxu0 %v368
    %653 = vmatpush1.msra.mxu0 %v367
    %654 = vmatprep.subr.mxu0 %v364
    %655 = vmatpush1.msra.mxu0 %v363
    %656 = vmatprep.subr.mxu0 %v360
    %657 = vmatpush1.msra.mxu0 %v359
    %658 = vmatprep.subr.mxu0 %v356
    %659 = vmatpush1.msra.mxu0 %v355
    %660 = vmatprep.subr.mxu0 %v352
    %661 = vmatpush1.msra.mxu0 %v351
    %662 = vmatprep.subr.mxu0 %v348
    %663 = vmatpush1.msra.mxu0 %v347
    %664 = vmatprep.subr.mxu0 0.0
    %665 = vmatpush2.msra.mxu0 0.0
    %666 = vmatprep.subr.mxu0 0.0
    %667 = vmatpush2.msra.mxu0 0.0
    %668 = vmatprep.subr.mxu0 0.0
    %669 = vmatpush2.msra.mxu0 0.0
    %670 = vmatprep.subr.mxu0 0.0
    %671 = vmatpush2.msra.mxu0 0.0
    %672 = vmatprep.subr.mxu0 0.0
    %673 = vmatpush2.msra.mxu0 0.0
    %674 = vmatprep.subr.mxu0 0.0
    %675 = vmatpush2.msra.mxu0 0.0
    %676 = vmatprep.subr.mxu0 0.0
    %677 = vmatpush2.msra.mxu0 0.0
    %678 = vmatprep.subr.mxu0 0.0
    %679 = vmatpush2.msra.mxu0 0.0
    %680 = vmatprep.subr.mxu0 0.0
    %681 = vmatpush2.msra.mxu0 0.0
    %682 = vmatprep.subr.mxu0 0.0
    %683 = vmatpush2.msra.mxu0 0.0
    %684 = vmatprep.subr.mxu0 0.0
    %685 = vmatpush2.msra.mxu0 0.0
    %686 = vmatprep.subr.mxu0 0.0
    %687 = vmatpush2.msra.mxu0 0.0
    %688 = vmatprep.subr.mxu0 0.0
    %689 = vmatpush2.msra.mxu0 0.0
    %690 = vmatprep.subr.mxu0 0.0
    %691 = vmatpush2.msra.mxu0 0.0
    %692 = vmatprep.subr.mxu0 0.0
    %693 = vmatpush2.msra.mxu0 0.0
    %694 = vmatprep.subr.mxu0 0.0
    %695 = vmatpush2.msra.mxu0 0.0
    %696 = vmatprep.mubr.f32.mxu0 0.0
    %697 = vmatmul.mubr.f32.gmra.mxu0 %v559
    %v698 = vpop.f32.mrf.mxu0
    %v699 = vadd.f32 0.0, %v698
    %v700 = vpop.f32.mrf.mxu0
    %v701 = vadd.f32 0.0, %v700
    %702 = vdwg.mxu0
    %v703 = vadd.f32 %v333, %v628
    %v704 = vadd.f32 %v334, %v630
    %v705 = vadd.f32 %v335, %v699
    %v706 = vadd.f32 %v336, %v701
    %v707 = vxor.u32 %v703, 2147483648
    %v708 = vxor.u32 %v704, 2147483648
    %v709 = vxor.u32 %v705, 2147483648
    %v710 = vxor.u32 %v706, 2147483648
    %v711 = vmul.f32 %v707, 1.442695
    %v712 = vpow.pop %v711
    %v713 = vmul.f32 %v708, 1.442695
    %v714 = vpow.pop %v713
    %v715 = vmul.f32 %v709, 1.442695
    %v716 = vpow.pop %v715
    %v717 = vmul.f32 %v710, 1.442695
    %v718 = vpow.pop %v717
    %v719 = vadd.f32 %v712, 1.0
    %v720 = vadd.f32 %v714, 1.0
    %v721 = vadd.f32 %v716, 1.0
    %v722 = vadd.f32 %v718, 1.0
    %v723 = vrcp.pop %v719
    %v724 = vmul.f32 1.0, %v723
    %v725 = vrcp.pop %v720
    %v726 = vmul.f32 1.0, %v725
    %v727 = vrcp.pop %v721
    %v728 = vmul.f32 1.0, %v727
    %v729 = vrcp.pop %v722
    %v730 = vmul.f32 1.0, %v729
    %v731 = vmul.f32 %v730, 2.0
    %v732 = vsub.f32 %v731, 1.0
    %v733 = vmul.f32 %v726, %v555
    %v734 = vmul.f32 %v724, %v732
    %v735 = vadd.f32 %v733, %v734
    %v736 = vtanh.pop %v735
    %v737 = vmul.f32 %v728, %v736
    %v739 = vsel %vm377, %v737, 0
    %741 = vmatprep.subr.mxu0 0.0
    %742 = vmatpush1.msra.mxu0 0.0
    %743 = vmatprep.subr.mxu0 0.0
    %744 = vmatpush1.msra.mxu0 0.0
    %745 = vmatprep.subr.mxu0 0.0
    %746 = vmatpush1.msra.mxu0 0.0
    %747 = vmatprep.subr.mxu0 0.0
    %748 = vmatpush1.msra.mxu0 0.0
    %749 = vmatprep.subr.mxu0 0.0
    %750 = vmatpush1.msra.mxu0 0.0
    %751 = vmatprep.subr.mxu0 0.0
    %752 = vmatpush1.msra.mxu0 0.0
    %753 = vmatprep.subr.mxu0 0.0
    %754 = vmatpush1.msra.mxu0 0.0
    %755 = vmatprep.subr.mxu0 0.0
    %756 = vmatpush1.msra.mxu0 0.0
    %757 = vmatprep.subr.mxu0 %v374
    %758 = vmatpush1.msra.mxu0 %v373
    %759 = vmatprep.subr.mxu0 %v370
    %760 = vmatpush1.msra.mxu0 %v369
    %761 = vmatprep.subr.mxu0 %v366
    %762 = vmatpush1.msra.mxu0 %v365
    %763 = vmatprep.subr.mxu0 %v362
    %764 = vmatpush1.msra.mxu0 %v361
    %765 = vmatprep.subr.mxu0 %v358
    %766 = vmatpush1.msra.mxu0 %v357
    %767 = vmatprep.subr.mxu0 %v354
    %768 = vmatpush1.msra.mxu0 %v353
    %769 = vmatprep.subr.mxu0 %v350
    %770 = vmatpush1.msra.mxu0 %v349
    %771 = vmatprep.subr.mxu0 %v346
    %772 = vmatpush1.msra.mxu0 %v345
    %773 = vmatprep.subr.mxu0 0.0
    %774 = vmatpush2.msra.mxu0 0.0
    %775 = vmatprep.subr.mxu0 0.0
    %776 = vmatpush2.msra.mxu0 0.0
    %777 = vmatprep.subr.mxu0 0.0
    %778 = vmatpush2.msra.mxu0 0.0
    %779 = vmatprep.subr.mxu0 0.0
    %780 = vmatpush2.msra.mxu0 0.0
    %781 = vmatprep.subr.mxu0 0.0
    %782 = vmatpush2.msra.mxu0 0.0
    %783 = vmatprep.subr.mxu0 0.0
    %784 = vmatpush2.msra.mxu0 0.0
    %785 = vmatprep.subr.mxu0 0.0
    %786 = vmatpush2.msra.mxu0 0.0
    %787 = vmatprep.subr.mxu0 0.0
    %788 = vmatpush2.msra.mxu0 0.0
    %789 = vmatprep.subr.mxu0 0.0
    %790 = vmatpush2.msra.mxu0 0.0
    %791 = vmatprep.subr.mxu0 0.0
    %792 = vmatpush2.msra.mxu0 0.0
    %793 = vmatprep.subr.mxu0 0.0
    %794 = vmatpush2.msra.mxu0 0.0
    %795 = vmatprep.subr.mxu0 0.0
    %796 = vmatpush2.msra.mxu0 0.0
    %797 = vmatprep.subr.mxu0 0.0
    %798 = vmatpush2.msra.mxu0 0.0
    %799 = vmatprep.subr.mxu0 0.0
    %800 = vmatpush2.msra.mxu0 0.0
    %801 = vmatprep.subr.mxu0 0.0
    %802 = vmatpush2.msra.mxu0 0.0
    %803 = vmatprep.subr.mxu0 0.0
    %804 = vmatpush2.msra.mxu0 0.0
    %805 = vmatprep.mubr.f32.mxu0 0.0
    %806 = vmatmul.mubr.f32.gmra.mxu0 %v739
    %v807 = vpop.f32.mrf.mxu0
    %v808 = vadd.f32 0.0, %v807
    %v809 = vpop.f32.mrf.mxu0
    %v810 = vadd.f32 0.0, %v809
    %811 = vdwg.mxu0
    %812 = vmatprep.subr.mxu0 0.0
    %813 = vmatpush1.msra.mxu0 0.0
    %814 = vmatprep.subr.mxu0 0.0
    %815 = vmatpush1.msra.mxu0 0.0
    %816 = vmatprep.subr.mxu0 0.0
    %817 = vmatpush1.msra.mxu0 0.0
    %818 = vmatprep.subr.mxu0 0.0
    %819 = vmatpush1.msra.mxu0 0.0
    %820 = vmatprep.subr.mxu0 0.0
    %821 = vmatpush1.msra.mxu0 0.0
    %822 = vmatprep.subr.mxu0 0.0
    %823 = vmatpush1.msra.mxu0 0.0
    %824 = vmatprep.subr.mxu0 0.0
    %825 = vmatpush1.msra.mxu0 0.0
    %826 = vmatprep.subr.mxu0 0.0
    %827 = vmatpush1.msra.mxu0 0.0
    %828 = vmatprep.subr.mxu0 %v376
    %829 = vmatpush1.msra.mxu0 %v375
    %830 = vmatprep.subr.mxu0 %v372
    %831 = vmatpush1.msra.mxu0 %v371
    %832 = vmatprep.subr.mxu0 %v368
    %833 = vmatpush1.msra.mxu0 %v367
    %834 = vmatprep.subr.mxu0 %v364
    %835 = vmatpush1.msra.mxu0 %v363
    %836 = vmatprep.subr.mxu0 %v360
    %837 = vmatpush1.msra.mxu0 %v359
    %838 = vmatprep.subr.mxu0 %v356
    %839 = vmatpush1.msra.mxu0 %v355
    %840 = vmatprep.subr.mxu0 %v352
    %841 = vmatpush1.msra.mxu0 %v351
    %842 = vmatprep.subr.mxu0 %v348
    %843 = vmatpush1.msra.mxu0 %v347
    %844 = vmatprep.subr.mxu0 0.0
    %845 = vmatpush2.msra.mxu0 0.0
    %846 = vmatprep.subr.mxu0 0.0
    %847 = vmatpush2.msra.mxu0 0.0
    %848 = vmatprep.subr.mxu0 0.0
    %849 = vmatpush2.msra.mxu0 0.0
    %850 = vmatprep.subr.mxu0 0.0
    %851 = vmatpush2.msra.mxu0 0.0
    %852 = vmatprep.subr.mxu0 0.0
    %853 = vmatpush2.msra.mxu0 0.0
    %854 = vmatprep.subr.mxu0 0.0
    %855 = vmatpush2.msra.mxu0 0.0
    %856 = vmatprep.subr.mxu0 0.0
    %857 = vmatpush2.msra.mxu0 0.0
    %858 = vmatprep.subr.mxu0 0.0
    %859 = vmatpush2.msra.mxu0 0.0
    %860 = vmatprep.subr.mxu0 0.0
    %861 = vmatpush2.msra.mxu0 0.0
    %862 = vmatprep.subr.mxu0 0.0
    %863 = vmatpush2.msra.mxu0 0.0
    %864 = vmatprep.subr.mxu0 0.0
    %865 = vmatpush2.msra.mxu0 0.0
    %866 = vmatprep.subr.mxu0 0.0
    %867 = vmatpush2.msra.mxu0 0.0
    %868 = vmatprep.subr.mxu0 0.0
    %869 = vmatpush2.msra.mxu0 0.0
    %870 = vmatprep.subr.mxu0 0.0
    %871 = vmatpush2.msra.mxu0 0.0
    %872 = vmatprep.subr.mxu0 0.0
    %873 = vmatpush2.msra.mxu0 0.0
    %874 = vmatprep.subr.mxu0 0.0
    %875 = vmatpush2.msra.mxu0 0.0
    %876 = vmatprep.mubr.f32.mxu0 0.0
    %877 = vmatmul.mubr.f32.gmra.mxu0 %v739
    %v878 = vpop.f32.mrf.mxu0
    %v879 = vadd.f32 0.0, %v878
    %v880 = vpop.f32.mrf.mxu0
    %v881 = vadd.f32 0.0, %v880
    %882 = vdwg.mxu0
    %v883 = vadd.f32 %v337, %v808
    %v884 = vadd.f32 %v338, %v810
    %v885 = vadd.f32 %v339, %v879
    %v886 = vadd.f32 %v340, %v881
    %v887 = vxor.u32 %v883, 2147483648
    %v888 = vxor.u32 %v884, 2147483648
    %v889 = vxor.u32 %v885, 2147483648
    %v890 = vxor.u32 %v886, 2147483648
    %v891 = vmul.f32 %v887, 1.442695
    %v892 = vpow.pop %v891
    %v893 = vmul.f32 %v888, 1.442695
    %v894 = vpow.pop %v893
    %v895 = vmul.f32 %v889, 1.442695
    %v896 = vpow.pop %v895
    %v897 = vmul.f32 %v890, 1.442695
    %v898 = vpow.pop %v897
    %v899 = vadd.f32 %v892, 1.0
    %v900 = vadd.f32 %v894, 1.0
    %v901 = vadd.f32 %v896, 1.0
    %v902 = vadd.f32 %v898, 1.0
    %v903 = vrcp.pop %v899
    %v904 = vmul.f32 1.0, %v903
    %v905 = vrcp.pop %v900
    %v906 = vmul.f32 1.0, %v905
    %v907 = vrcp.pop %v901
    %v908 = vmul.f32 1.0, %v907
    %v909 = vrcp.pop %v902
    %v910 = vmul.f32 1.0, %v909
    %v911 = vmul.f32 %v910, 2.0
    %v912 = vsub.f32 %v911, 1.0
    %v913 = vmul.f32 %v906, %v735
    %v914 = vmul.f32 %v904, %v912
    %v915 = vadd.f32 %v913, %v914
    %v916 = vtanh.pop %v915
    %v917 = vmul.f32 %v908, %v916
    %v919 = vsel %vm377, %v917, 0
    %921 = vmatprep.subr.mxu0 0.0
    %922 = vmatpush1.msra.mxu0 0.0
    %923 = vmatprep.subr.mxu0 0.0
    %924 = vmatpush1.msra.mxu0 0.0
    %925 = vmatprep.subr.mxu0 0.0
    %926 = vmatpush1.msra.mxu0 0.0
    %927 = vmatprep.subr.mxu0 0.0
    %928 = vmatpush1.msra.mxu0 0.0
    %929 = vmatprep.subr.mxu0 0.0
    %930 = vmatpush1.msra.mxu0 0.0
    %931 = vmatprep.subr.mxu0 0.0
    %932 = vmatpush1.msra.mxu0 0.0
    %933 = vmatprep.subr.mxu0 0.0
    %934 = vmatpush1.msra.mxu0 0.0
    %935 = vmatprep.subr.mxu0 0.0
    %936 = vmatpush1.msra.mxu0 0.0
    %937 = vmatprep.subr.mxu0 %v374
    %938 = vmatpush1.msra.mxu0 %v373
    %939 = vmatprep.subr.mxu0 %v370
    %940 = vmatpush1.msra.mxu0 %v369
    %941 = vmatprep.subr.mxu0 %v366
    %942 = vmatpush1.msra.mxu0 %v365
    %943 = vmatprep.subr.mxu0 %v362
    %944 = vmatpush1.msra.mxu0 %v361
    %945 = vmatprep.subr.mxu0 %v358
    %946 = vmatpush1.msra.mxu0 %v357
    %947 = vmatprep.subr.mxu0 %v354
    %948 = vmatpush1.msra.mxu0 %v353
    %949 = vmatprep.subr.mxu0 %v350
    %950 = vmatpush1.msra.mxu0 %v349
    %951 = vmatprep.subr.mxu0 %v346
    %952 = vmatpush1.msra.mxu0 %v345
    %953 = vmatprep.subr.mxu0 0.0
    %954 = vmatpush2.msra.mxu0 0.0
    %955 = vmatprep.subr.mxu0 0.0
    %956 = vmatpush2.msra.mxu0 0.0
    %957 = vmatprep.subr.mxu0 0.0
    %958 = vmatpush2.msra.mxu0 0.0
    %959 = vmatprep.subr.mxu0 0.0
    %960 = vmatpush2.msra.mxu0 0.0
    %961 = vmatprep.subr.mxu0 0.0
    %962 = vmatpush2.msra.mxu0 0.0
    %963 = vmatprep.subr.mxu0 0.0
    %964 = vmatpush2.msra.mxu0 0.0
    %965 = vmatprep.subr.mxu0 0.0
    %966 = vmatpush2.msra.mxu0 0.0
    %967 = vmatprep.subr.mxu0 0.0
    %968 = vmatpush2.msra.mxu0 0.0
    %969 = vmatprep.subr.mxu0 0.0
    %970 = vmatpush2.msra.mxu0 0.0
    %971 = vmatprep.subr.mxu0 0.0
    %972 = vmatpush2.msra.mxu0 0.0
    %973 = vmatprep.subr.mxu0 0.0
    %974 = vmatpush2.msra.mxu0 0.0
    %975 = vmatprep.subr.mxu0 0.0
    %976 = vmatpush2.msra.mxu0 0.0
    %977 = vmatprep.subr.mxu0 0.0
    %978 = vmatpush2.msra.mxu0 0.0
    %979 = vmatprep.subr.mxu0 0.0
    %980 = vmatpush2.msra.mxu0 0.0
    %981 = vmatprep.subr.mxu0 0.0
    %982 = vmatpush2.msra.mxu0 0.0
    %983 = vmatprep.subr.mxu0 0.0
    %984 = vmatpush2.msra.mxu0 0.0
    %985 = vmatprep.mubr.f32.mxu0 0.0
    %986 = vmatmul.mubr.f32.gmra.mxu0 %v919
    %v987 = vpop.f32.mrf.mxu0
    %v988 = vadd.f32 0.0, %v987
    %v989 = vpop.f32.mrf.mxu0
    %v990 = vadd.f32 0.0, %v989
    %991 = vdwg.mxu0
    %992 = vmatprep.subr.mxu0 0.0
    %993 = vmatpush1.msra.mxu0 0.0
    %994 = vmatprep.subr.mxu0 0.0
    %995 = vmatpush1.msra.mxu0 0.0
    %996 = vmatprep.subr.mxu0 0.0
    %997 = vmatpush1.msra.mxu0 0.0
    %998 = vmatprep.subr.mxu0 0.0
    %999 = vmatpush1.msra.mxu0 0.0
    %1000 = vmatprep.subr.mxu0 0.0
    %1001 = vmatpush1.msra.mxu0 0.0
    %1002 = vmatprep.subr.mxu0 0.0
    %1003 = vmatpush1.msra.mxu0 0.0
    %1004 = vmatprep.subr.mxu0 0.0
    %1005 = vmatpush1.msra.mxu0 0.0
    %1006 = vmatprep.subr.mxu0 0.0
    %1007 = vmatpush1.msra.mxu0 0.0
    %1008 = vmatprep.subr.mxu0 %v376
    %1009 = vmatpush1.msra.mxu0 %v375
    %1010 = vmatprep.subr.mxu0 %v372
    %1011 = vmatpush1.msra.mxu0 %v371
    %1012 = vmatprep.subr.mxu0 %v368
    %1013 = vmatpush1.msra.mxu0 %v367
    %1014 = vmatprep.subr.mxu0 %v364
    %1015 = vmatpush1.msra.mxu0 %v363
    %1016 = vmatprep.subr.mxu0 %v360
    %1017 = vmatpush1.msra.mxu0 %v359
    %1018 = vmatprep.subr.mxu0 %v356
    %1019 = vmatpush1.msra.mxu0 %v355
    %1020 = vmatprep.subr.mxu0 %v352
    %1021 = vmatpush1.msra.mxu0 %v351
    %1022 = vmatprep.subr.mxu0 %v348
    %1023 = vmatpush1.msra.mxu0 %v347
    %1024 = vmatprep.subr.mxu0 0.0
    %1025 = vmatpush2.msra.mxu0 0.0
    %1026 = vmatprep.subr.mxu0 0.0
    %1027 = vmatpush2.msra.mxu0 0.0
    %1028 = vmatprep.subr.mxu0 0.0
    %1029 = vmatpush2.msra.mxu0 0.0
    %1030 = vmatprep.subr.mxu0 0.0
    %1031 = vmatpush2.msra.mxu0 0.0
    %1032 = vmatprep.subr.mxu0 0.0
    %1033 = vmatpush2.msra.mxu0 0.0
    %1034 = vmatprep.subr.mxu0 0.0
    %1035 = vmatpush2.msra.mxu0 0.0
    %1036 = vmatprep.subr.mxu0 0.0
    %1037 = vmatpush2.msra.mxu0 0.0
    %1038 = vmatprep.subr.mxu0 0.0
    %1039 = vmatpush2.msra.mxu0 0.0
    %1040 = vmatprep.subr.mxu0 0.0
    %1041 = vmatpush2.msra.mxu0 0.0
    %1042 = vmatprep.subr.mxu0 0.0
    %1043 = vmatpush2.msra.mxu0 0.0
    %1044 = vmatprep.subr.mxu0 0.0
    %1045 = vmatpush2.msra.mxu0 0.0
    %1046 = vmatprep.subr.mxu0 0.0
    %1047 = vmatpush2.msra.mxu0 0.0
    %1048 = vmatprep.subr.mxu0 0.0
    %1049 = vmatpush2.msra.mxu0 0.0
    %1050 = vmatprep.subr.mxu0 0.0
    %1051 = vmatpush2.msra.mxu0 0.0
    %1052 = vmatprep.subr.mxu0 0.0
    %1053 = vmatpush2.msra.mxu0 0.0
    %1054 = vmatprep.subr.mxu0 0.0
    %1055 = vmatpush2.msra.mxu0 0.0
    %1056 = vmatprep.mubr.f32.mxu0 0.0
    %1057 = vmatmul.mubr.f32.gmra.mxu0 %v919
    %v1058 = vpop.f32.mrf.mxu0
    %v1059 = vadd.f32 0.0, %v1058
    %v1060 = vpop.f32.mrf.mxu0
    %v1061 = vadd.f32 0.0, %v1060
    %1062 = vdwg.mxu0
    %v1063 = vadd.f32 %v341, %v988
    %v1064 = vadd.f32 %v342, %v990
    %v1065 = vadd.f32 %v343, %v1059
    %v1066 = vadd.f32 %v344, %v1061
    %v1067 = vxor.u32 %v1063, 2147483648
    %v1068 = vxor.u32 %v1064, 2147483648
    %v1069 = vxor.u32 %v1065, 2147483648
    %v1070 = vxor.u32 %v1066, 2147483648
    %v1071 = vmul.f32 %v1067, 1.442695
    %v1072 = vpow.pop %v1071
    %v1073 = vmul.f32 %v1068, 1.442695
    %v1074 = vpow.pop %v1073
    %v1075 = vmul.f32 %v1069, 1.442695
    %v1076 = vpow.pop %v1075
    %v1077 = vmul.f32 %v1070, 1.442695
    %v1078 = vpow.pop %v1077
    %v1079 = vadd.f32 %v1072, 1.0
    %v1080 = vadd.f32 %v1074, 1.0
    %v1081 = vadd.f32 %v1076, 1.0
    %v1082 = vadd.f32 %v1078, 1.0
    %v1083 = vrcp.pop %v1079
    %v1084 = vmul.f32 1.0, %v1083
    %v1085 = vrcp.pop %v1080
    %v1086 = vmul.f32 1.0, %v1085
    %v1087 = vrcp.pop %v1081
    %v1088 = vmul.f32 1.0, %v1087
    %v1089 = vrcp.pop %v1082
    %v1090 = vmul.f32 1.0, %v1089
    %v1091 = vmul.f32 %v1090, 2.0
    %v1092 = vsub.f32 %v1091, 1.0
    %v1093 = vmul.f32 %v1086, %v915
    %v1094 = vmul.f32 %v1084, %v1092
    %v1095 = vadd.f32 %v1093, %v1094
    %v1096 = vtanh.pop %v1095
    %v1097 = vmul.f32 %v1088, %v1096
    %vm1098 = vcmp.lt.s32.totalorder %v273, 32
    %v1099 = vsel %vm1098, %v557, %v1097
    %v1100 = vsel %vm1098, %v737, %v917
    %v1101 = vsel %vm1098, %v917, %v737
    %v1102 = vsel %vm1098, %v1097, %v557
    %v1103 = vld [vmem:[%s4] sm:$0xff]
    %v1104 = vld [vmem:[%s4 + $0x8] sm:$0xff]
    %v1105 = vld [vmem:[%s4 + $0x10] sm:$0xff]
    %v1106 = vld [vmem:[%s4 + $0x18] sm:$0xff]
    %v1107 = vld [vmem:[%s4 + $0x20] sm:$0xff]
    %v1108 = vld [vmem:[%s4 + $0x28] sm:$0xff]
    %v1109 = vld [vmem:[%s4 + $0x30] sm:$0xff]
    %v1110 = vld [vmem:[%s4 + $0x38] sm:$0xff]
    %v1112 = vsel %vm377, %v1099, 0
    %v1115 = vsel %vm377, %v1100, 0
    %v1118 = vsel %vm377, %v1101, 0
    %v1121 = vsel %vm377, %v1102, 0
    %1123 = vmatprep.subr.mxu0 0.0
    %1124 = vmatpush1.msra.mxu0 0.0
    %1125 = vmatprep.subr.mxu0 0.0
    %1126 = vmatpush1.msra.mxu0 0.0
    %1127 = vmatprep.subr.mxu0 0.0
    %1128 = vmatpush1.msra.mxu0 0.0
    %1129 = vmatprep.subr.mxu0 0.0
    %1130 = vmatpush1.msra.mxu0 0.0
    %1131 = vmatprep.subr.mxu0 0.0
    %1132 = vmatpush1.msra.mxu0 0.0
    %1133 = vmatprep.subr.mxu0 0.0
    %1134 = vmatpush1.msra.mxu0 0.0
    %1135 = vmatprep.subr.mxu0 0.0
    %1136 = vmatpush1.msra.mxu0 0.0
    %1137 = vmatprep.subr.mxu0 0.0
    %1138 = vmatpush1.msra.mxu0 0.0
    %1139 = vmatprep.subr.mxu0 0.0
    %1140 = vmatpush1.msra.mxu0 %v1110
    %1141 = vmatprep.subr.mxu0 0.0
    %1142 = vmatpush1.msra.mxu0 %v1109
    %1143 = vmatprep.subr.mxu0 0.0
    %1144 = vmatpush1.msra.mxu0 %v1108
    %1145 = vmatprep.subr.mxu0 0.0
    %1146 = vmatpush1.msra.mxu0 %v1107
    %1147 = vmatprep.subr.mxu0 0.0
    %1148 = vmatpush1.msra.mxu0 %v1106
    %1149 = vmatprep.subr.mxu0 0.0
    %1150 = vmatpush1.msra.mxu0 %v1105
    %1151 = vmatprep.subr.mxu0 0.0
    %1152 = vmatpush1.msra.mxu0 %v1104
    %1153 = vmatprep.subr.mxu0 0.0
    %1154 = vmatpush1.msra.mxu0 %v1103
    %1155 = vmatprep.subr.mxu0 0.0
    %1156 = vmatpush2.msra.mxu0 0.0
    %1157 = vmatprep.subr.mxu0 0.0
    %1158 = vmatpush2.msra.mxu0 0.0
    %1159 = vmatprep.subr.mxu0 0.0
    %1160 = vmatpush2.msra.mxu0 0.0
    %1161 = vmatprep.subr.mxu0 0.0
    %1162 = vmatpush2.msra.mxu0 0.0
    %1163 = vmatprep.subr.mxu0 0.0
    %1164 = vmatpush2.msra.mxu0 0.0
    %1165 = vmatprep.subr.mxu0 0.0
    %1166 = vmatpush2.msra.mxu0 0.0
    %1167 = vmatprep.subr.mxu0 0.0
    %1168 = vmatpush2.msra.mxu0 0.0
    %1169 = vmatprep.subr.mxu0 0.0
    %1170 = vmatpush2.msra.mxu0 0.0
    %1171 = vmatprep.subr.mxu0 0.0
    %1172 = vmatpush2.msra.mxu0 0.0
    %1173 = vmatprep.subr.mxu0 0.0
    %1174 = vmatpush2.msra.mxu0 0.0
    %1175 = vmatprep.subr.mxu0 0.0
    %1176 = vmatpush2.msra.mxu0 0.0
    %1177 = vmatprep.subr.mxu0 0.0
    %1178 = vmatpush2.msra.mxu0 0.0
    %1179 = vmatprep.subr.mxu0 0.0
    %1180 = vmatpush2.msra.mxu0 0.0
    %1181 = vmatprep.subr.mxu0 0.0
    %1182 = vmatpush2.msra.mxu0 0.0
    %1183 = vmatprep.subr.mxu0 0.0
    %1184 = vmatpush2.msra.mxu0 0.0
    %1185 = vmatprep.subr.mxu0 0.0
    %1186 = vmatpush2.msra.mxu0 0.0
    %1187 = vmatprep.mubr.f32.mxu0 0.0
    %1188 = vmatmul.mubr.f32.gmra.mxu0 %v1112
    %v1189 = vpop.f32.mrf.mxu0
    %v1190 = vadd.f32 0.0, %v1189
    %v1191 = vpop.f32.mrf.mxu0
    %1192 = vmatprep.mubr.f32.mxu0 0.0
    %1193 = vmatmul.mubr.f32.gmra.mxu0 %v1115
    %v1194 = vpop.f32.mrf.mxu0
    %v1195 = vadd.f32 0.0, %v1194
    %v1196 = vpop.f32.mrf.mxu0
    %1197 = vmatprep.mubr.f32.mxu0 0.0
    %1198 = vmatmul.mubr.f32.gmra.mxu0 %v1118
    %v1199 = vpop.f32.mrf.mxu0
    %v1200 = vadd.f32 0.0, %v1199
    %v1201 = vpop.f32.mrf.mxu0
    %1202 = vmatprep.mubr.f32.mxu0 0.0
    %1203 = vmatmul.mubr.f32.gmra.mxu0 %v1121
    %v1204 = vpop.f32.mrf.mxu0
    %v1205 = vadd.f32 0.0, %v1204
    %v1206 = vpop.f32.mrf.mxu0
    %1207 = vdwg.mxu0
    %v1208 = vld [vmem:[%s5] sm:$0xff]
    %v1209 = vld [vmem:[%s5 + $0x8] sm:$0xff]
    %v1210 = vld [vmem:[%s5 + $0x10] sm:$0xff]
    %v1211 = vld [vmem:[%s5 + $0x18] sm:$0xff]
    %v1212 = vmul.f32 %v1190, %v1208
    %v1213 = vmul.f32 %v1195, %v1209
    %v1214 = vmul.f32 %v1200, %v1210
    %v1215 = vmul.f32 %v1205, %v1211
    %v1216 = vld [vmem:[%s6] sm:$0xff]
    %v1217 = vld [vmem:[%s6 + $0x8] sm:$0xff]
    %v1218 = vld [vmem:[%s6 + $0x10] sm:$0xff]
    %v1219 = vld [vmem:[%s6 + $0x18] sm:$0xff]
    %v1220 = vld [vmem:[%s6 + $0x20] sm:$0xff]
    %vm1221 = vcmask 326656
    %v1223 = vsel %vm1221, %v1212, 0
    %v1226 = vsel %vm1221, %v1213, 0
    %v1229 = vsel %vm1221, %v1214, 0
    %v1232 = vsel %vm1221, %v1215, 0
    %1234 = vmatprep.subr.mxu0 0.0
    %1235 = vmatpush1.msra.mxu0 0.0
    %1236 = vmatprep.subr.mxu0 0.0
    %1237 = vmatpush1.msra.mxu0 0.0
    %1238 = vmatprep.subr.mxu0 0.0
    %1239 = vmatpush1.msra.mxu0 0.0
    %1240 = vmatprep.subr.mxu0 0.0
    %1241 = vmatpush1.msra.mxu0 0.0
    %1242 = vmatprep.subr.mxu0 0.0
    %1243 = vmatpush1.msra.mxu0 0.0
    %1244 = vmatprep.subr.mxu0 0.0
    %1245 = vmatpush1.msra.mxu0 0.0
    %1246 = vmatprep.subr.mxu0 0.0
    %1247 = vmatpush1.msra.mxu0 0.0
    %1248 = vmatprep.subr.mxu0 0.0
    %1249 = vmatpush1.msra.mxu0 0.0
    %1250 = vmatprep.subr.mxu0 0.0
    %1251 = vmatpush1.msra.mxu0 0.0
    %1252 = vmatprep.subr.mxu0 0.0
    %1253 = vmatpush1.msra.mxu0 0.0
    %1254 = vmatprep.subr.mxu0 0.0
    %1255 = vmatpush1.msra.mxu0 0.0
    %1256 = vmatprep.subr.mxu0 0.0
    %1257 = vmatpush1.msra.mxu0 %v1220
    %1258 = vmatprep.subr.mxu0 0.0
    %1259 = vmatpush1.msra.mxu0 %v1219
    %1260 = vmatprep.subr.mxu0 0.0
    %1261 = vmatpush1.msra.mxu0 %v1218
    %1262 = vmatprep.subr.mxu0 0.0
    %1263 = vmatpush1.msra.mxu0 %v1217
    %1264 = vmatprep.subr.mxu0 0.0
    %1265 = vmatpush1.msra.mxu0 %v1216
    %1266 = vmatprep.subr.mxu0 0.0
    %1267 = vmatpush2.msra.mxu0 0.0
    %1268 = vmatprep.subr.mxu0 0.0
    %1269 = vmatpush2.msra.mxu0 0.0
    %1270 = vmatprep.subr.mxu0 0.0
    %1271 = vmatpush2.msra.mxu0 0.0
    %1272 = vmatprep.subr.mxu0 0.0
    %1273 = vmatpush2.msra.mxu0 0.0
    %1274 = vmatprep.subr.mxu0 0.0
    %1275 = vmatpush2.msra.mxu0 0.0
    %1276 = vmatprep.subr.mxu0 0.0
    %1277 = vmatpush2.msra.mxu0 0.0
    %1278 = vmatprep.subr.mxu0 0.0
    %1279 = vmatpush2.msra.mxu0 0.0
    %1280 = vmatprep.subr.mxu0 0.0
    %1281 = vmatpush2.msra.mxu0 0.0
    %1282 = vmatprep.subr.mxu0 0.0
    %1283 = vmatpush2.msra.mxu0 0.0
    %1284 = vmatprep.subr.mxu0 0.0
    %1285 = vmatpush2.msra.mxu0 0.0
    %1286 = vmatprep.subr.mxu0 0.0
    %1287 = vmatpush2.msra.mxu0 0.0
    %1288 = vmatprep.subr.mxu0 0.0
    %1289 = vmatpush2.msra.mxu0 0.0
    %1290 = vmatprep.subr.mxu0 0.0
    %1291 = vmatpush2.msra.mxu0 0.0
    %1292 = vmatprep.subr.mxu0 0.0
    %1293 = vmatpush2.msra.mxu0 0.0
    %1294 = vmatprep.subr.mxu0 0.0
    %1295 = vmatpush2.msra.mxu0 0.0
    %1296 = vmatprep.subr.mxu0 0.0
    %1297 = vmatpush2.msra.mxu0 0.0
    %1298 = vmatprep.mubr.f32.mxu0 0.0
    %1299 = vmatmul.mubr.f32.gmra.mxu0 %v1223
    %v1300 = vpop.f32.mrf.mxu0
    %v1301 = vadd.f32 0.0, %v1300
    %v1302 = vpop.f32.mrf.mxu0
    %1303 = vmatprep.mubr.f32.mxu0 0.0
    %1304 = vmatmul.mubr.f32.gmra.mxu0 %v1226
    %v1305 = vpop.f32.mrf.mxu0
    %v1306 = vadd.f32 0.0, %v1305
    %v1307 = vpop.f32.mrf.mxu0
    %1308 = vmatprep.mubr.f32.mxu0 0.0
    %1309 = vmatmul.mubr.f32.gmra.mxu0 %v1229
    %v1310 = vpop.f32.mrf.mxu0
    %v1311 = vadd.f32 0.0, %v1310
    %v1312 = vpop.f32.mrf.mxu0
    %1313 = vmatprep.mubr.f32.mxu0 0.0
    %1314 = vmatmul.mubr.f32.gmra.mxu0 %v1232
    %v1315 = vpop.f32.mrf.mxu0
    %v1316 = vadd.f32 0.0, %v1315
    %v1317 = vpop.f32.mrf.mxu0
    %1318 = vdwg.mxu0
    %v1319 = vld [vmem:[%s7] sm:$0xf]
    %v1320 = vld [vmem:[%s8] sm:$0x1]
    %v1322 = vlaneseq
    %v1323 = vshrl.u32 %v1322, 7
    %v1324 = vsub.s32 0, %v1323
    %v1325 = vrot.slane %v1320, %v1324
    %vm1327 = vcmask 261120
    %v1329 = vsel %vm1327, %v1319, 0
    %1331 = vmatprep.subr.mxu0 0.0
    %1332 = vmatpush1.msra.mxu0 0.0
    %1333 = vmatprep.subr.mxu0 0.0
    %1334 = vmatpush1.msra.mxu0 0.0
    %1335 = vmatprep.subr.mxu0 0.0
    %1336 = vmatpush1.msra.mxu0 0.0
    %1337 = vmatprep.subr.mxu0 0.0
    %1338 = vmatpush1.msra.mxu0 0.0
    %1339 = vmatprep.subr.mxu0 0.0
    %1340 = vmatpush1.msra.mxu0 0.0
    %1341 = vmatprep.subr.mxu0 0.0
    %1342 = vmatpush1.msra.mxu0 0.0
    %1343 = vmatprep.subr.mxu0 0.0
    %1344 = vmatpush1.msra.mxu0 0.0
    %1345 = vmatprep.subr.mxu0 0.0
    %1346 = vmatpush1.msra.mxu0 0.0
    %1347 = vmatprep.subr.mxu0 0.0
    %1348 = vmatpush1.msra.mxu0 0.0
    %1349 = vmatprep.subr.mxu0 0.0
    %1350 = vmatpush1.msra.mxu0 0.0
    %1351 = vmatprep.subr.mxu0 0.0
    %1352 = vmatpush1.msra.mxu0 0.0
    %1353 = vmatprep.subr.mxu0 0.0
    %1354 = vmatpush1.msra.mxu0 0.0
    %1355 = vmatprep.subr.mxu0 0.0
    %1356 = vmatpush1.msra.mxu0 %v1316
    %1357 = vmatprep.subr.mxu0 0.0
    %1358 = vmatpush1.msra.mxu0 %v1311
    %1359 = vmatprep.subr.mxu0 0.0
    %1360 = vmatpush1.msra.mxu0 %v1306
    %1361 = vmatprep.subr.mxu0 0.0
    %1362 = vmatpush1.msra.mxu0 %v1301
    %1363 = vmatprep.subr.mxu0 0.0
    %1364 = vmatpush2.msra.mxu0 0.0
    %1365 = vmatprep.subr.mxu0 0.0
    %1366 = vmatpush2.msra.mxu0 0.0
    %1367 = vmatprep.subr.mxu0 0.0
    %1368 = vmatpush2.msra.mxu0 0.0
    %1369 = vmatprep.subr.mxu0 0.0
    %1370 = vmatpush2.msra.mxu0 0.0
    %1371 = vmatprep.subr.mxu0 0.0
    %1372 = vmatpush2.msra.mxu0 0.0
    %1373 = vmatprep.subr.mxu0 0.0
    %1374 = vmatpush2.msra.mxu0 0.0
    %1375 = vmatprep.subr.mxu0 0.0
    %1376 = vmatpush2.msra.mxu0 0.0
    %1377 = vmatprep.subr.mxu0 0.0
    %1378 = vmatpush2.msra.mxu0 0.0
    %1379 = vmatprep.subr.mxu0 0.0
    %1380 = vmatpush2.msra.mxu0 0.0
    %1381 = vmatprep.subr.mxu0 0.0
    %1382 = vmatpush2.msra.mxu0 0.0
    %1383 = vmatprep.subr.mxu0 0.0
    %1384 = vmatpush2.msra.mxu0 0.0
    %1385 = vmatprep.subr.mxu0 0.0
    %1386 = vmatpush2.msra.mxu0 0.0
    %1387 = vmatprep.subr.mxu0 0.0
    %1388 = vmatpush2.msra.mxu0 0.0
    %1389 = vmatprep.subr.mxu0 0.0
    %1390 = vmatpush2.msra.mxu0 0.0
    %1391 = vmatprep.subr.mxu0 0.0
    %1392 = vmatpush2.msra.mxu0 0.0
    %1393 = vmatprep.subr.mxu0 0.0
    %1394 = vmatpush2.msra.mxu0 0.0
    %1395 = vmatprep.mubr.f32.mxu0 0.0
    %1396 = vmatmul.mubr.f32.gmra.mxu0 %v1329
    %v1397 = vpop.f32.mrf.mxu0
    %v1398 = vadd.f32 %v1325, %v1397
    %v1399 = vpop.f32.mrf.mxu0
    %1400 = vdwg.mxu0
    %vm1401 = vcmask 35840
    %1402 = vst.msk [vmem:[#allocation5] sm:$0xf] %vm1401, %v1398
    // Predicated region
    $region42: #{tpu_custom_call.1} parent=1 // pred_check
      _
    $region43: #{tpu_custom_call.1} parent=1 // pred_check_branch
      %1404 = sbr.rel (0) target = $region45
    $region44: #{tpu_custom_call.1} parent=1 // pred_region
      %s1406 = ssub.s32 64, 64
      %1407 = vsyncadd [#allocation4], %s1406
      %s1409 = sshll.u32 [#allocation5], 4
      %s1410 = int_to_ptr.vmem [resolvable:$true] %s1409
      %1412 = dma.vmem_to_hbm [thread:$0]  %s1410, 64, %s9, [#allocation4]
    $region45: #{tpu_custom_call.1} parent=1 // pred_fallthru
      _
    // Predicated region
    $region46: #{tpu_custom_call.1} parent=1 // pred_check
      _
    $region47: #{tpu_custom_call.1} parent=1 // pred_check_branch
      %1414 = sbr.rel (0) target = $region49
    $region48: #{tpu_custom_call.1} parent=1 // pred_region
      %1415 = dma.done [#allocation4], 64
    $region49: #{tpu_custom_call.1} parent=1 // pred_fallthru
      _
    %1416 = vsyncpa [#allocation3], 1
    %1417 = vsyncpa [#allocation4], 1

</llo_original>
